<compile_context>
chip_gen: v6e
topology: v6e:2x2x1
jax: 0.10.0
libtpu: 0.0.40
codegen_flags: <defaults>
</compile_context>

<pallas_src>
from functools import partial

import jax
import jax.numpy as jnp
import numpy as np
from jax.experimental import pallas as pl
from jax.experimental.pallas import tpu as pltpu

LANE = 128        # TPU lane width (output channels padded to this)
_LPAD = 8         # sublane-aligned left offset inside the VMEM scratch;
                  # column _LPAD-1 is the conv's left zero-pad column.


def _round_up(x, m):
    return (x + m - 1) // m * m


def _pick_row_tile(h_out, target=8):
    """Largest divisor of h_out that is <= target (fallback: whole height)."""
    best = 1
    for th in range(1, min(target, h_out) + 1):
        if h_out % th == 0:
            best = th
    if best < 4:
        best = h_out
    return best


# ------------------------- kernel 1: BN statistics -------------------------- #

def bn_stats_kernel(x_ref, sum_ref, sq_ref):
    """Single-pass per-channel sum and sum-of-squares, accumulated over batch."""
    @pl.when(pl.program_id(0) == 0)
    def _():
        sum_ref[...] = jnp.zeros_like(sum_ref)
        sq_ref[...] = jnp.zeros_like(sq_ref)

    x = x_ref[0]                                   # (H, W, Cin)
    s = jnp.sum(x, axis=0)                         # (W, Cin)
    q = jnp.sum(x * x, axis=0)                     # (W, Cin)
    sum_ref[...] += jnp.sum(s, axis=0, keepdims=True)   # (1, Cin)
    sq_ref[...] += jnp.sum(q, axis=0, keepdims=True)


# ---------------- kernel 2: fused BN-affine + ReLU + pad + conv -------------- #

def fused_bn_relu_conv3x3_kernel(x_ref, scale_ref, shift_ref, w_ref, b_ref,
                                 o_ref, yp_ref, *, stride, th, w_out):
    """One (batch, row-tile) grid step of the fused op.

    x_ref:     (1, H, W, Cin)    full image (index_map ignores the row-tile
                                  axis, so it is DMA'd once per batch element)
    scale_ref: (1, Cin)          folded-BN per-channel scale
    shift_ref: (1, Cin)          folded-BN per-channel shift
    w_ref:     (9*Cin, Cout_pad) im2col weights, bf16
    b_ref:     (1, Cout_pad)     bias, f32
    o_ref:     (1, th, W_out, Cout_pad)
    yp_ref:    VMEM scratch (H+2, W+_LPAD+1, Cin): activated, zero-padded image
    """
    _, H, W, cin = x_ref.shape
    cout_p = w_ref.shape[-1]
    rt = pl.program_id(1)

    # Build the BN+ReLU'd, zero-padded image once per batch element.  The
    # row-tile grid axis is "arbitrary" (sequential), so rt == 0 runs first.
    @pl.when(rt == 0)
    def _():
        yp_ref[...] = jnp.zeros_like(yp_ref)
        y = jnp.maximum(x_ref[0] * scale_ref[...] + shift_ref[...], 0.0)
        # Aligned store: sublane offset _LPAD (=8); rows offset only on the
        # outer dim.  Padding ring stays zero.
        yp_ref[1:H + 1, _LPAD:_LPAD + W, :] = y

    # Row window for this output tile (2-row halo is already in the scratch).
    in_rows = (th - 1) * stride + 3
    r0 = rt * th * stride
    tile = yp_ref[pl.ds(r0, in_rows), :, :]        # (in_rows, W+_LPAD+1, Cin)

    # im2col: the 9 taps concatenated along channels -> ONE MXU matmul with
    # K = 9*Cin instead of 9 small K=Cin matmuls.
    taps = []
    for kh in range(3):
        for kw in range(3):
            taps.append(tile[kh:kh + (th - 1) * stride + 1:stride,
                             _LPAD - 1 + kw:
                             _LPAD - 1 + kw + (w_out - 1) * stride + 1:stride,
                             :])                    # (th, w_out, Cin)
    patches = (jnp.concatenate(taps, axis=-1)       # (th, w_out, 9*Cin)
               .reshape(th * w_out, 9 * cin)
               .astype(jnp.bfloat16))

    acc = jnp.dot(patches, w_ref[...],              # (th*w_out, Cout_pad)
                  preferred_element_type=jnp.float32)
    acc = acc + b_ref[...]
    # Lane-dense store: last dim is Cout_pad (multiple of 128).
    o_ref[...] = acc.reshape(1, th, w_out, cout_p).astype(o_ref.dtype)


# ------------------------------ JAX wrapper -------------------------------- #

def conv2d_module_forward(x_nchw, params, *, stride=1, bn=True, eps=1e-5):
    """Forward pass matching the PyTorch Conv2D module (training-mode BN)."""
    x = jnp.transpose(x_nchw, (0, 2, 3, 1)).astype(jnp.float32)   # NCHW -> NHWC
    N, H, W, Cin = x.shape

    w_oihw = params["conv_w"].astype(jnp.float32)   # (Cout, Cin, 3, 3)
    Cout = w_oihw.shape[0]
    cout_p = _round_up(Cout, LANE)                  # lane-dense output width

    # (Cout,Cin,3,3) -> (3,3,Cin,Cout) -> im2col (9*Cin, Cout) -> pad Cout -> bf16
    w_flat = jnp.transpose(w_oihw, (2, 3, 1, 0)).reshape(9 * Cin, Cout)
    w_flat = jnp.pad(w_flat, ((0, 0), (0, cout_p - Cout))).astype(jnp.bfloat16)
    b_pad = jnp.pad(params["conv_b"].astype(jnp.float32),
                    (0, cout_p - Cout)).reshape(1, cout_p)

    if bn:
        # Single-pass batch statistics (one HBM read of x) in Pallas.
        s1, s2 = pl.pallas_call(
            bn_stats_kernel,
            out_shape=(jax.ShapeDtypeStruct((1, Cin), jnp.float32),
                       jax.ShapeDtypeStruct((1, Cin), jnp.float32)),
            grid=(N,),
            in_specs=[pl.BlockSpec((1, H, W, Cin), lambda n: (n, 0, 0, 0))],
            out_specs=(pl.BlockSpec((1, Cin), lambda n: (0, 0)),
                       pl.BlockSpec((1, Cin), lambda n: (0, 0))),
            compiler_params=pltpu.CompilerParams(
                dimension_semantics=("arbitrary",)),
        )(x)
        cnt = float(N * H * W)
        mean = s1[0] / cnt
        var = jnp.maximum(s2[0] / cnt - mean * mean, 0.0)     # biased variance
        inv = params["bn_gamma"].astype(jnp.float32) / jnp.sqrt(var + eps)
        scale = inv.reshape(1, Cin)
        shift = (params["bn_beta"].astype(jnp.float32) - mean * inv).reshape(1, Cin)
    else:
        scale = jnp.ones((1, Cin), jnp.float32)
        shift = jnp.zeros((1, Cin), jnp.float32)

    H_out = (H + 2 - 3) // stride + 1
    W_out = (W + 2 - 3) // stride + 1
    th = _pick_row_tile(H_out)
    n_rt = H_out // th

    kernel = partial(fused_bn_relu_conv3x3_kernel,
                     stride=stride, th=th, w_out=W_out)
    out_p = pl.pallas_call(
        kernel,
        out_shape=jax.ShapeDtypeStruct((N, H_out, W_out, cout_p), jnp.float32),
        grid=(N, n_rt),
        in_specs=[
            # Full image per batch element; constant in the row-tile axis so
            # the block is fetched once per n and revisited across row tiles.
            pl.BlockSpec((1, H, W, Cin), lambda n, r: (n, 0, 0, 0)),
            pl.BlockSpec((1, Cin), lambda n, r: (0, 0)),
            pl.BlockSpec((1, Cin), lambda n, r: (0, 0)),
            pl.BlockSpec((9 * Cin, cout_p), lambda n, r: (0, 0)),
            pl.BlockSpec((1, cout_p), lambda n, r: (0, 0)),
        ],
        out_specs=pl.BlockSpec((1, th, W_out, cout_p),
                               lambda n, r: (n, r, 0, 0)),
        scratch_shapes=[pltpu.VMEM((H + 2, W + _LPAD + 1, Cin), jnp.float32)],
        compiler_params=pltpu.CompilerParams(
            # batch axis shards across TensorCores; row-tile axis is sequential
            # so the rt==0 scratch fill is valid and the x block is reused.
            dimension_semantics=("parallel", "arbitrary"),
            vmem_limit_bytes=48 * 1024 * 1024),
    )(x, scale, shift, w_flat, b_pad)

    out = out_p[..., :Cout]                       # drop lane padding
    return jnp.transpose(out, (0, 3, 1, 2))       # NHWC -> NCHW


# ------------------------------- reference --------------------------------- #

def _reference(x_nchw, params, *, stride=1, bn=True, eps=1e-5):
    x = jnp.transpose(x_nchw, (0, 2, 3, 1)).astype(jnp.float32)
    if bn:
        mean = jnp.mean(x, axis=(0, 1, 2))
        var = jnp.mean((x - mean) ** 2, axis=(0, 1, 2))
        x = (x - mean) / jnp.sqrt(var + eps) * params["bn_gamma"] + params["bn_beta"]
    x = jnp.maximum(x, 0.0)
    w_hwio = jnp.transpose(params["conv_w"], (2, 3, 1, 0))
    out = jax.lax.conv_general_dilated(
        x, w_hwio, window_strides=(stride, stride),
        padding=((1, 1), (1, 1)),
        dimension_numbers=("NHWC", "HWIO", "NHWC"),
    ) + params["conv_b"]
    return jnp.transpose(out, (0, 3, 1, 2))


# --------------------------------- main ------------------------------------ #

if __name__ == "__main__":
    N, Cin, H, W = 2, 4, 16, 16
    Cout = 8
    stride = 1

    key = jax.random.PRNGKey(0)
    k_x, k_w, k_b = jax.random.split(key, 3)

    x = jax.random.normal(k_x, (N, Cin, H, W), dtype=jnp.float32)

    params = {
        # nn.Conv2d(in_dim, out_dim, (3,3)): weight (Cout, Cin, 3, 3), bias (Cout,)
        "conv_w": 0.1 * jax.random.normal(k_w, (Cout, Cin, 3, 3), dtype=jnp.float32),
        "conv_b": 0.1 * jax.random.normal(k_b, (Cout,), dtype=jnp.float32),
        # nn.BatchNorm2d(in_dim) default init: gamma=1, beta=0
        "bn_gamma": jnp.ones((Cin,), jnp.float32),
        "bn_beta": jnp.zeros((Cin,), jnp.float32),
    }

    fwd = jax.jit(partial(conv2d_module_forward, stride=stride, bn=True))
    out = jax.block_until_ready(fwd(x, params))

    ref = _reference(x, params, stride=stride, bn=True)
    # bf16 matmul operands (f32 accumulation) -> compare with bf16-level tolerance.
    np.testing.assert_allclose(np.asarray(out), np.asarray(ref),
                               rtol=2e-2, atol=2e-2)

    print("KERNEL_OK")
</pallas_src>

<mosaic_0001>
module attributes {stable_mosaic.version = 11 : i64} {
  func.func @bn_stats_kernel(%arg0: i32, %arg1: memref<1x16x16x4xf32, #tpu.memory_space<vmem>>, %arg2: memref<1x4xf32, #tpu.memory_space<vmem>>, %arg3: memref<1x4xf32, #tpu.memory_space<vmem>>) attributes {dimension_semantics = [#tpu.dimension_semantics<arbitrary>], iteration_bounds = array<i64: 2>, scalar_prefetch = 0 : i64, scratch_operands = 0 : i64, tpu.core_type = #tpu.core_type<tc>, window_params = [{transform_indices = @transform_0, window_bounds = array<i64: 1, 16, 16, 4>}, {pipeline_mode = #tpu.pipeline_mode<synchronous>, transform_indices = @transform_1, window_bounds = array<i64: 1, 4>}, {pipeline_mode = #tpu.pipeline_mode<synchronous>, transform_indices = @transform_2, window_bounds = array<i64: 1, 4>}]} {
    %c0_i32 = arith.constant 0 : i32
    %0 = arith.cmpi eq, %arg0, %c0_i32 : i32
    %1 = arith.extui %0 : i1 to i32
    %c0_i32_0 = arith.constant 0 : i32
    %2 = arith.cmpi ne, %1, %c0_i32_0 : i32
    scf.if %2 {
      %cst_15 = arith.constant 0.000000e+00 : f32
      %18 = vector.broadcast %cst_15 : f32 to vector<1x4xf32>
      %c0_16 = arith.constant 0 : index
      %c0_17 = arith.constant 0 : index
      %19 = vector.load %arg2[%c0_16, %c0_17] : memref<1x4xf32, #tpu.memory_space<vmem>>, vector<1x4xf32>
      tpu.vector_store %arg2[%c0_16, %c0_17], %18 {strides = array<i32>} : memref<1x4xf32, #tpu.memory_space<vmem>>, vector<1x4xf32>,
      %cst_18 = arith.constant 0.000000e+00 : f32
      %20 = vector.broadcast %cst_18 : f32 to vector<1x4xf32>
      %c0_19 = arith.constant 0 : index
      %c0_20 = arith.constant 0 : index
      %21 = vector.load %arg3[%c0_19, %c0_20] : memref<1x4xf32, #tpu.memory_space<vmem>>, vector<1x4xf32>
      tpu.vector_store %arg3[%c0_19, %c0_20], %20 {strides = array<i32>} : memref<1x4xf32, #tpu.memory_space<vmem>>, vector<1x4xf32>,
    } else {
    }
    %c0 = arith.constant 0 : index
    %c0_1 = arith.constant 0 : index
    %c0_2 = arith.constant 0 : index
    %c0_3 = arith.constant 0 : index
    %3 = vector.load %arg1[%c0, %c0_1, %c0_2, %c0_3] : memref<1x16x16x4xf32, #tpu.memory_space<vmem>>, vector<1x16x16x4xf32>
    %4 = vector.shape_cast %3 : vector<1x16x16x4xf32> to vector<16x16x4xf32>
    %cst = arith.constant dense<0.000000e+00> : vector<16x4xf32>
    %5 = vector.multi_reduction <add>, %4, %cst [0] : vector<16x16x4xf32> to vector<16x4xf32>
    %6 = arith.mulf %4, %4 : vector<16x16x4xf32>
    %cst_4 = arith.constant dense<0.000000e+00> : vector<16x4xf32>
    %7 = vector.multi_reduction <add>, %6, %cst_4 [0] : vector<16x16x4xf32> to vector<16x4xf32>
    %c0_5 = arith.constant 0 : index
    %c0_6 = arith.constant 0 : index
    %8 = vector.load %arg2[%c0_5, %c0_6] : memref<1x4xf32, #tpu.memory_space<vmem>>, vector<1x4xf32>
    %cst_7 = arith.constant dense<0.000000e+00> : vector<4xf32>
    %9 = vector.multi_reduction <add>, %5, %cst_7 [0] : vector<16x4xf32> to vector<4xf32>
    %10 = vector.shape_cast %9 : vector<4xf32> to vector<1x4xf32>
    %11 = arith.addf %8, %10 : vector<1x4xf32>
    %c0_8 = arith.constant 0 : index
    %c0_9 = arith.constant 0 : index
    %12 = vector.load %arg2[%c0_8, %c0_9] : memref<1x4xf32, #tpu.memory_space<vmem>>, vector<1x4xf32>
    tpu.vector_store %arg2[%c0_8, %c0_9], %11 {strides = array<i32>} : memref<1x4xf32, #tpu.memory_space<vmem>>, vector<1x4xf32>,
    %c0_10 = arith.constant 0 : index
    %c0_11 = arith.constant 0 : index
    %13 = vector.load %arg3[%c0_10, %c0_11] : memref<1x4xf32, #tpu.memory_space<vmem>>, vector<1x4xf32>
    %cst_12 = arith.constant dense<0.000000e+00> : vector<4xf32>
    %14 = vector.multi_reduction <add>, %7, %cst_12 [0] : vector<16x4xf32> to vector<4xf32>
    %15 = vector.shape_cast %14 : vector<4xf32> to vector<1x4xf32>
    %16 = arith.addf %13, %15 : vector<1x4xf32>
    %c0_13 = arith.constant 0 : index
    %c0_14 = arith.constant 0 : index
    %17 = vector.load %arg3[%c0_13, %c0_14] : memref<1x4xf32, #tpu.memory_space<vmem>>, vector<1x4xf32>
    tpu.vector_store %arg3[%c0_13, %c0_14], %16 {strides = array<i32>} : memref<1x4xf32, #tpu.memory_space<vmem>>, vector<1x4xf32>,
    return
  }
  func.func @transform_0(%arg0: i32) -> (i32, i32, i32, i32) {
    %c0_i32 = arith.constant 0 : i32
    %c0_i32_0 = arith.constant 0 : i32
    %c0_i32_1 = arith.constant 0 : i32
    %c0_i32_2 = arith.constant 0 : i32
    return %arg0, %c0_i32, %c0_i32_0, %c0_i32_1 : i32, i32, i32, i32
  }
  func.func @transform_1(%arg0: i32) -> (i32, i32) {
    %c0_i32 = arith.constant 0 : i32
    %c0_i32_0 = arith.constant 0 : i32
    %c0_i32_1 = arith.constant 0 : i32
    return %c0_i32, %c0_i32_0 : i32, i32
  }
  func.func @transform_2(%arg0: i32) -> (i32, i32) {
    %c0_i32 = arith.constant 0 : i32
    %c0_i32_0 = arith.constant 0 : i32
    %c0_i32_1 = arith.constant 0 : i32
    return %c0_i32, %c0_i32_0 : i32, i32
  }
}

module attributes {stable_mosaic.version = 11 : i64} {
  func.func @fused_bn_relu_conv3x3_kernel(%arg0: i32, %arg1: i32, %arg2: memref<1x16x16x4xf32, #tpu.memory_space<vmem>>, %arg3: memref<1x4xf32, #tpu.memory_space<vmem>>, %arg4: memref<1x4xf32, #tpu.memory_space<vmem>>, %arg5: memref<36x128xbf16, #tpu.memory_space<vmem>>, %arg6: memref<1x128xf32, #tpu.memory_space<vmem>>, %arg7: memref<1x8x16x128xf32, #tpu.memory_space<vmem>>, %arg8: memref<18x25x4xf32, #tpu.memory_space<vmem>>) attributes {dimension_semantics = [#tpu.dimension_semantics<parallel>, #tpu.dimension_semantics<arbitrary>], iteration_bounds = array<i64: 2, 2>, scalar_prefetch = 0 : i64, scratch_operands = 1 : i64, tpu.core_type = #tpu.core_type<tc>, window_params = [{transform_indices = @transform_0, window_bounds = array<i64: 1, 16, 16, 4>}, {pipeline_mode = #tpu.pipeline_mode<synchronous>, transform_indices = @transform_1, window_bounds = array<i64: 1, 4>}, {pipeline_mode = #tpu.pipeline_mode<synchronous>, transform_indices = @transform_2, window_bounds = array<i64: 1, 4>}, {pipeline_mode = #tpu.pipeline_mode<synchronous>, transform_indices = @transform_3, window_bounds = array<i64: 36, 128>}, {pipeline_mode = #tpu.pipeline_mode<synchronous>, transform_indices = @transform_4, window_bounds = array<i64: 1, 128>}, {transform_indices = @transform_5, window_bounds = array<i64: 1, 8, 16, 128>}]} {
    %c0_i32 = arith.constant 0 : i32
    %0 = arith.cmpi eq, %arg1, %c0_i32 : i32
    %1 = arith.extui %0 : i1 to i32
    %c0_i32_0 = arith.constant 0 : i32
    %2 = arith.cmpi ne, %1, %c0_i32_0 : i32
    scf.if %2 {
      %cst_10 = arith.constant 0.000000e+00 : f32
      %26 = vector.broadcast %cst_10 : f32 to vector<18x25x4xf32>
      %c0_11 = arith.constant 0 : index
      %c0_12 = arith.constant 0 : index
      %c0_13 = arith.constant 0 : index
      %27 = vector.load %arg8[%c0_11, %c0_12, %c0_13] : memref<18x25x4xf32, #tpu.memory_space<vmem>>, vector<18x25x4xf32>
      tpu.vector_store %arg8[%c0_11, %c0_12, %c0_13], %26 {strides = array<i32>} : memref<18x25x4xf32, #tpu.memory_space<vmem>>, vector<18x25x4xf32>,
      %c0_14 = arith.constant 0 : index
      %c0_15 = arith.constant 0 : index
      %c0_16 = arith.constant 0 : index
      %c0_17 = arith.constant 0 : index
      %28 = vector.load %arg2[%c0_14, %c0_15, %c0_16, %c0_17] : memref<1x16x16x4xf32, #tpu.memory_space<vmem>>, vector<1x16x16x4xf32>
      %29 = vector.shape_cast %28 : vector<1x16x16x4xf32> to vector<16x16x4xf32>
      %c0_18 = arith.constant 0 : index
      %c0_19 = arith.constant 0 : index
      %30 = vector.load %arg3[%c0_18, %c0_19] : memref<1x4xf32, #tpu.memory_space<vmem>>, vector<1x4xf32>
      %31 = vector.shape_cast %30 : vector<1x4xf32> to vector<1x1x4xf32>
      %32 = vector.broadcast %31 : vector<1x1x4xf32> to vector<16x16x4xf32>
      %33 = arith.mulf %29, %32 : vector<16x16x4xf32>
      %c0_20 = arith.constant 0 : index
      %c0_21 = arith.constant 0 : index
      %34 = vector.load %arg4[%c0_20, %c0_21] : memref<1x4xf32, #tpu.memory_space<vmem>>, vector<1x4xf32>
      %35 = vector.shape_cast %34 : vector<1x4xf32> to vector<1x1x4xf32>
      %36 = vector.broadcast %35 : vector<1x1x4xf32> to vector<16x16x4xf32>
      %37 = arith.addf %33, %36 : vector<16x16x4xf32>
      %cst_22 = arith.constant 0.000000e+00 : f32
      %38 = vector.broadcast %cst_22 : f32 to vector<16x16x4xf32>
      %39 = arith.maximumf %37, %38 : vector<16x16x4xf32>
      %c1 = arith.constant 1 : index
      %c8 = arith.constant 8 : index
      %c0_23 = arith.constant 0 : index
      %40 = vector.load %arg8[%c1, %c8, %c0_23] : memref<18x25x4xf32, #tpu.memory_space<vmem>>, vector<16x16x4xf32>
      tpu.vector_store %arg8[%c1, %c8, %c0_23], %39 {strides = array<i32>} : memref<18x25x4xf32, #tpu.memory_space<vmem>>, vector<16x16x4xf32>,
    } else {
    }
    %c8_i32 = arith.constant 8 : i32
    %3 = arith.muli %arg1, %c8_i32 : i32
    %c1_i32 = arith.constant 1 : i32
    %4 = arith.muli %3, %c1_i32 : i32
    %5 = arith.index_cast %4 : i32 to index
    %c0 = arith.constant 0 : index
    %c0_1 = arith.constant 0 : index
    %6 = vector.load %arg8[%5, %c0, %c0_1] : memref<18x25x4xf32, #tpu.memory_space<vmem>>, vector<10x25x4xf32>
    %7 = vector.extract_strided_slice %6 {offsets = [0, 7, 0], sizes = [8, 16, 4], strides = [1, 1, 1]} : vector<10x25x4xf32> to vector<8x16x4xf32>
    %8 = vector.extract_strided_slice %6 {offsets = [0, 8, 0], sizes = [8, 16, 4], strides = [1, 1, 1]} : vector<10x25x4xf32> to vector<8x16x4xf32>
    %9 = vector.extract_strided_slice %6 {offsets = [0, 9, 0], sizes = [8, 16, 4], strides = [1, 1, 1]} : vector<10x25x4xf32> to vector<8x16x4xf32>
    %10 = vector.extract_strided_slice %6 {offsets = [1, 7, 0], sizes = [8, 16, 4], strides = [1, 1, 1]} : vector<10x25x4xf32> to vector<8x16x4xf32>
    %11 = vector.extract_strided_slice %6 {offsets = [1, 8, 0], sizes = [8, 16, 4], strides = [1, 1, 1]} : vector<10x25x4xf32> to vector<8x16x4xf32>
    %12 = vector.extract_strided_slice %6 {offsets = [1, 9, 0], sizes = [8, 16, 4], strides = [1, 1, 1]} : vector<10x25x4xf32> to vector<8x16x4xf32>
    %13 = vector.extract_strided_slice %6 {offsets = [2, 7, 0], sizes = [8, 16, 4], strides = [1, 1, 1]} : vector<10x25x4xf32> to vector<8x16x4xf32>
    %14 = vector.extract_strided_slice %6 {offsets = [2, 8, 0], sizes = [8, 16, 4], strides = [1, 1, 1]} : vector<10x25x4xf32> to vector<8x16x4xf32>
    %15 = vector.extract_strided_slice %6 {offsets = [2, 9, 0], sizes = [8, 16, 4], strides = [1, 1, 1]} : vector<10x25x4xf32> to vector<8x16x4xf32>
    %16 = tpu.concatenate %7, %8, %9, %10, %11, %12, %13, %14, %15 in 2 : vector<8x16x4xf32>, vector<8x16x4xf32>, vector<8x16x4xf32>, vector<8x16x4xf32>, vector<8x16x4xf32>, vector<8x16x4xf32>, vector<8x16x4xf32>, vector<8x16x4xf32>, vector<8x16x4xf32> -> vector<8x16x36xf32>
    %17 = vector.shape_cast %16 : vector<8x16x36xf32> to vector<128x36xf32>
    %18 = arith.truncf %17 : vector<128x36xf32> to vector<128x36xbf16>
    %c0_2 = arith.constant 0 : index
    %c0_3 = arith.constant 0 : index
    %19 = vector.load %arg5[%c0_2, %c0_3] : memref<36x128xbf16, #tpu.memory_space<vmem>>, vector<36x128xbf16>
    %cst = arith.constant dense<0.000000e+00> : vector<128x128xf32>
    %20 = tpu.matmul %18, %19, %cst {dimension_numbers = #tpu.dot_dimension_numbers<[1], [0], [0], [1], [0, 0, 1, 1], [], []>} : vector<128x36xbf16>, vector<36x128xbf16>, vector<128x128xf32> -> vector<128x128xf32>
    %c0_4 = arith.constant 0 : index
    %c0_5 = arith.constant 0 : index
    %21 = vector.load %arg6[%c0_4, %c0_5] : memref<1x128xf32, #tpu.memory_space<vmem>>, vector<1x128xf32>
    %22 = vector.broadcast %21 : vector<1x128xf32> to vector<128x128xf32>
    %23 = arith.addf %20, %22 : vector<128x128xf32>
    %24 = vector.shape_cast %23 : vector<128x128xf32> to vector<1x8x16x128xf32>
    %c0_6 = arith.constant 0 : index
    %c0_7 = arith.constant 0 : index
    %c0_8 = arith.constant 0 : index
    %c0_9 = arith.constant 0 : index
    %25 = vector.load %arg7[%c0_6, %c0_7, %c0_8, %c0_9] : memref<1x8x16x128xf32, #tpu.memory_space<vmem>>, vector<1x8x16x128xf32>
    tpu.vector_store %arg7[%c0_6, %c0_7, %c0_8, %c0_9], %24 {strides = array<i32>} : memref<1x8x16x128xf32, #tpu.memory_space<vmem>>, vector<1x8x16x128xf32>,
    return
  }
  func.func @transform_0(%arg0: i32, %arg1: i32) -> (i32, i32, i32, i32) {
    %c0_i32 = arith.constant 0 : i32
    %c0_i32_0 = arith.constant 0 : i32
    %c0_i32_1 = arith.constant 0 : i32
    %c0_i32_2 = arith.constant 0 : i32
    return %arg0, %c0_i32, %c0_i32_0, %c0_i32_1 : i32, i32, i32, i32
  }
  func.func @transform_1(%arg0: i32, %arg1: i32) -> (i32, i32) {
    %c0_i32 = arith.constant 0 : i32
    %c0_i32_0 = arith.constant 0 : i32
    %c0_i32_1 = arith.constant 0 : i32
    return %c0_i32, %c0_i32_0 : i32, i32
  }
  func.func @transform_2(%arg0: i32, %arg1: i32) -> (i32, i32) {
    %c0_i32 = arith.constant 0 : i32
    %c0_i32_0 = arith.constant 0 : i32
    %c0_i32_1 = arith.constant 0 : i32
    return %c0_i32, %c0_i32_0 : i32, i32
  }
  func.func @transform_3(%arg0: i32, %arg1: i32) -> (i32, i32) {
    %c0_i32 = arith.constant 0 : i32
    %c0_i32_0 = arith.constant 0 : i32
    %c0_i32_1 = arith.constant 0 : i32
    return %c0_i32, %c0_i32_0 : i32, i32
  }
  func.func @transform_4(%arg0: i32, %arg1: i32) -> (i32, i32) {
    %c0_i32 = arith.constant 0 : i32
    %c0_i32_0 = arith.constant 0 : i32
    %c0_i32_1 = arith.constant 0 : i32
    return %c0_i32, %c0_i32_0 : i32, i32
  }
  func.func @transform_5(%arg0: i32, %arg1: i32) -> (i32, i32, i32, i32) {
    %c0_i32 = arith.constant 0 : i32
    %c0_i32_0 = arith.constant 0 : i32
    %c0_i32_1 = arith.constant 0 : i32
    return %arg0, %arg1, %c0_i32, %c0_i32_0 : i32, i32, i32, i32
  }
}

</mosaic_0001>

<llo_original>
// kernel: conv2d_module_forward.2
$region0: #{conv2d_module_forward.2}
  #allocation0 [shape = 'u32[]', space=smem, size = 0x4, offset = 0x4, fixed_abs, tag = 'smem constant byte address 0x4 - core index']
  #allocation1 [shape = 'u32[144,128]{1,0:T(1,128)}', space=vmem, size = 0x12000, scoped, tag = 'internal scratch']
  %s0 = inlined_call_operand.vmem [shape: f32[2,16,16,4], index: 0, kind: input, shape index: {}]
  %s1 = inlined_call_operand.vmem [shape: f32[1,4], index: 1, kind: output, shape index: {0}]
  %s2 = inlined_call_operand.vmem [shape: f32[1,4], index: 2, kind: output, shape index: {1}]
  %3 = xla_tuple %s1, %s2
  %s4 = sld [smem:[#allocation0]]
  $region49: #{conv2d_module_forward.2} parent=0
    _
  %s6 = ssub.s32 1, %s4
  %s7 = scalar_select 0, %s6, %s4
  loop: start=0, step=1, limit=4
  $region2: #{conv2d_module_forward.2} parent=0 // loop_pre_header
    _
  $region3: #{conv2d_module_forward.2} parent=0 // loop_header
    %s9 = sphi 0, %s13
    %p10 = scmp.ge.s32.totalorder %s9, 4
    %s19 = sphi 0, %s21
    %s22 = sphi 0, %s19
    %s23 = sphi 0, %s22
    %s39 = sphi 0, %s23
    %s43 = sphi 0, %s43
    %s45 = sphi 0, %s43
    %s46 = sphi 0, %s45
    %s60 = sphi 0, %s46
    %s64 = sphi 0, %s64
    %s66 = sphi 0, %s64
    %s67 = sphi 0, %s66
    %s81 = sphi 0, %s67
  $region4: #{conv2d_module_forward.2} parent=0 // loop_header_branch
    %12 = sbr.rel (%p10) target = $region8
  $region5: #{conv2d_module_forward.2} parent=0 // loop_body
    %s14 = ssub.s32 %s9, 1
    %s15 = ssub.s32 %s9, 2
    %s16 = sadd.s32 %s9, 1
    %s17 = ssub.s32 %s9, %s16
    %p18 = scmp.eq.s32.totalorder %s17, 0
    %s20 = sadd.s32 %s19, 1
    %s21 = scalar_select %p18, %s19, %s20
    %p24 = pneg %p18
    %p25 = scmp.eq.s32.totalorder %s9, 1
    %p26 = por %p24, %p25
    %p27 = scmp.ne.s32.totalorder %s19, %s22
    %p28 = scmp.eq.s32.totalorder %s9, 0
    %p29 = por %p27, %p28
    %p30 = scmp.ne.s32.totalorder %s19, %s22
    %p31 = scmp.eq.s32.totalorder %s14, 1
    %p32 = por %p30, %p31
    %p33 = scmp.ne.s32.totalorder %s22, %s23
    %p34 = scmp.eq.s32.totalorder %s14, 0
    %p35 = por %p33, %p34
    %p36 = scmp.ne.s32.totalorder %s22, %s23
    %p37 = scmp.eq.s32.totalorder %s15, 1
    %p38 = por %p36, %p37
    %p40 = scmp.ne.s32.totalorder %s23, %s39
    %p41 = scmp.eq.s32.totalorder %s15, 0
    %p42 = por %p40, %p41
    %s44 = sadd.s32 %s43, 1
    %p47 = scmp.eq.s32.totalorder %s9, 1
    %p48 = scmp.ne.s32.totalorder %s43, %s45
    %p49 = scmp.eq.s32.totalorder %s9, 0
    %p50 = por %p48, %p49
    %p51 = scmp.ne.s32.totalorder %s43, %s45
    %p52 = scmp.eq.s32.totalorder %s14, 1
    %p53 = por %p51, %p52
    %p54 = scmp.ne.s32.totalorder %s45, %s46
    %p55 = scmp.eq.s32.totalorder %s14, 0
    %p56 = por %p54, %p55
    %p57 = scmp.ne.s32.totalorder %s45, %s46
    %p58 = scmp.eq.s32.totalorder %s15, 1
    %p59 = por %p57, %p58
    %p61 = scmp.ne.s32.totalorder %s46, %s60
    %p62 = scmp.eq.s32.totalorder %s15, 0
    %p63 = por %p61, %p62
    %s65 = sadd.s32 %s64, 1
    %p68 = scmp.eq.s32.totalorder %s9, 1
    %p69 = scmp.ne.s32.totalorder %s64, %s66
    %p70 = scmp.eq.s32.totalorder %s9, 0
    %p71 = por %p69, %p70
    %p72 = scmp.ne.s32.totalorder %s64, %s66
    %p73 = scmp.eq.s32.totalorder %s14, 1
    %p74 = por %p72, %p73
    %p75 = scmp.ne.s32.totalorder %s66, %s67
    %p76 = scmp.eq.s32.totalorder %s14, 0
    %p77 = por %p75, %p76
    %p78 = scmp.ne.s32.totalorder %s66, %s67
    %p79 = scmp.eq.s32.totalorder %s15, 1
    %p80 = por %p78, %p79
    %p82 = scmp.ne.s32.totalorder %s67, %s81
    %p83 = scmp.eq.s32.totalorder %s15, 0
    %p84 = por %p82, %p83
    %p85 = scmp.le.s32.totalorder 1, %s9
    %p86 = scmp.lt.s32.totalorder %s9, 3
    %p87 = pnand %p85, %p86
    %p88 = pneg %p87
    // Predicated region
    $region9: #{conv2d_module_forward.2} parent=5 // pred_check
      _
    $region10: #{conv2d_module_forward.2} parent=5 // pred_check_branch
      %90 = sbr.rel (%p87) target = $region12
    $region11: #{conv2d_module_forward.2} parent=5 // pred_region
      %s91 = ssub.s32 %s9, 1
    $region12: #{conv2d_module_forward.2} parent=5 // pred_fallthru
      _
    %p92 = scmp.lt.s32.totalorder %s9, 2
    // Predicated region
    $region13: #{conv2d_module_forward.2} parent=5 // pred_check
      %p93 = pneg %p92
    $region14: #{conv2d_module_forward.2} parent=5 // pred_check_branch
      %95 = sbr.rel (%p93) target = $region16
    $region15: #{conv2d_module_forward.2} parent=5 // pred_region
      // Predicated region
      $region17: #{conv2d_module_forward.2} parent=15 // pred_check
        %p96 = pneg %p29
      $region18: #{conv2d_module_forward.2} parent=15 // pred_check_branch
        %98 = sbr.rel (%p96) target = $region20
      $region19: #{conv2d_module_forward.2} parent=15 // pred_region
        %p99 = scmp.lt.s32.totalorder %s9, 1
        %s100 = scalar_select %p99, %s9, 1
        %s101 = smul.addr %s100, 32
        %s102 = smul.addr %s101, 8
        %s103 = scalar_lea.vmem %s0, %s102
      $region20: #{conv2d_module_forward.2} parent=15 // pred_fallthru
        _
    $region16: #{conv2d_module_forward.2} parent=5 // pred_fallthru
      _
    %p104 = scmp.le.s32.totalorder 1, %s9
    %p105 = scmp.lt.s32.totalorder %s9, 3
    %p106 = pnand %p104, %p105
    %p107 = pneg %p106
    // Predicated region
    $region21: #{conv2d_module_forward.2} parent=5 // pred_check
      _
    $region22: #{conv2d_module_forward.2} parent=5 // pred_check_branch
      %109 = sbr.rel (%p106) target = $region24
    $region23: #{conv2d_module_forward.2} parent=5 // pred_region
      %s110 = ssub.s32 %s9, 1
      %p111 = scmp.lt.s32.totalorder %s14, 1
      %s112 = scalar_select %p111, %s14, 1
      %s113 = smul.addr %s112, 32
      %s114 = smul.addr %s113, 8
      %s115 = scalar_lea.vmem %s0, %s114
      %p116 = pneg %p35
      %p117 = pneg %p32
      %p118 = pneg %p56
      %p119 = pneg %p53
      %p120 = pneg %p77
      %p121 = pneg %p74
      %p122 = scmp.lt.s32.totalorder %s14, 1
      %s123 = scalar_select %p122, %s14, 1
      %s124 = smul.addr %s123, 32
      %s125 = smul.addr %s124, 8
      %s126 = scalar_lea.vmem %s0, %s125
      %p127 = scmp.eq.s32.totalorder %s14, 0
      // Predicated region
      $region25: #{conv2d_module_forward.2} parent=23 // pred_check
        %p128 = pneg %p127
      $region26: #{conv2d_module_forward.2} parent=23 // pred_check_branch
        %130 = sbr.rel (%p128) target = $region28
      $region27: #{conv2d_module_forward.2} parent=23 // pred_region
        %vm131 = vcmask 24576
        %132 = vst.msk [vmem:[%s1] sm:$0x1] %vm131, 0.0
        %133 = vst.msk [vmem:[%s2] sm:$0x1] %vm131, 0.0
      $region28: #{conv2d_module_forward.2} parent=23 // pred_fallthru
        _
      %v134 = vld [vmem:[%s126] sm:$0xff]
      %v135 = vld [vmem:[%s126 + $0x8] sm:$0xff]
      %v136 = vld [vmem:[%s126 + $0x10] sm:$0xff]
      %v137 = vld [vmem:[%s126 + $0x18] sm:$0xff]
      %v138 = vld [vmem:[%s126 + $0x20] sm:$0xff]
      %v139 = vld [vmem:[%s126 + $0x28] sm:$0xff]
      %v140 = vld [vmem:[%s126 + $0x30] sm:$0xff]
      %v141 = vld [vmem:[%s126 + $0x38] sm:$0xff]
      %v142 = vld [vmem:[%s126 + $0x40] sm:$0xff]
      %v143 = vld [vmem:[%s126 + $0x48] sm:$0xff]
      %v144 = vld [vmem:[%s126 + $0x50] sm:$0xff]
      %v145 = vld [vmem:[%s126 + $0x58] sm:$0xff]
      %v146 = vld [vmem:[%s126 + $0x60] sm:$0xff]
      %v147 = vld [vmem:[%s126 + $0x68] sm:$0xff]
      %v148 = vld [vmem:[%s126 + $0x70] sm:$0xff]
      %v149 = vld [vmem:[%s126 + $0x78] sm:$0xff]
      %v150 = vld [vmem:[%s126 + $0x80] sm:$0xff]
      %v151 = vld [vmem:[%s126 + $0x88] sm:$0xff]
      %v152 = vld [vmem:[%s126 + $0x90] sm:$0xff]
      %v153 = vld [vmem:[%s126 + $0x98] sm:$0xff]
      %v154 = vld [vmem:[%s126 + $0xa0] sm:$0xff]
      %v155 = vld [vmem:[%s126 + $0xa8] sm:$0xff]
      %v156 = vld [vmem:[%s126 + $0xb0] sm:$0xff]
      %v157 = vld [vmem:[%s126 + $0xb8] sm:$0xff]
      %v158 = vld [vmem:[%s126 + $0xc0] sm:$0xff]
      %v159 = vld [vmem:[%s126 + $0xc8] sm:$0xff]
      %v160 = vld [vmem:[%s126 + $0xd0] sm:$0xff]
      %v161 = vld [vmem:[%s126 + $0xd8] sm:$0xff]
      %v162 = vld [vmem:[%s126 + $0xe0] sm:$0xff]
      %v163 = vld [vmem:[%s126 + $0xe8] sm:$0xff]
      %v164 = vld [vmem:[%s126 + $0xf0] sm:$0xff]
      %v165 = vld [vmem:[%s126 + $0xf8] sm:$0xff]
      %vm166 = vcmask 31744
      %v167 = vsel %vm166, %v134, 0.0
      %v168 = vsel %vm166, %v136, 0.0
      %v169 = vadd.f32 %v167, %v168
      %v170 = vsel %vm166, %v138, 0.0
      %v171 = vadd.f32 %v169, %v170
      %v172 = vsel %vm166, %v140, 0.0
      %v173 = vadd.f32 %v171, %v172
      %v174 = vsel %vm166, %v142, 0.0
      %v175 = vadd.f32 %v173, %v174
      %v176 = vsel %vm166, %v144, 0.0
      %v177 = vadd.f32 %v175, %v176
      %v178 = vsel %vm166, %v146, 0.0
      %v179 = vadd.f32 %v177, %v178
      %v180 = vsel %vm166, %v148, 0.0
      %v181 = vadd.f32 %v179, %v180
      %v182 = vsel %vm166, %v150, 0.0
      %v183 = vadd.f32 %v181, %v182
      %v184 = vsel %vm166, %v152, 0.0
      %v185 = vadd.f32 %v183, %v184
      %v186 = vsel %vm166, %v154, 0.0
      %v187 = vadd.f32 %v185, %v186
      %v188 = vsel %vm166, %v156, 0.0
      %v189 = vadd.f32 %v187, %v188
      %v190 = vsel %vm166, %v158, 0.0
      %v191 = vadd.f32 %v189, %v190
      %v192 = vsel %vm166, %v160, 0.0
      %v193 = vadd.f32 %v191, %v192
      %v194 = vsel %vm166, %v162, 0.0
      %v195 = vadd.f32 %v193, %v194
      %v196 = vsel %vm166, %v164, 0.0
      %v197 = vadd.f32 %v195, %v196
      %v198 = vsel %vm166, %v135, 0.0
      %v199 = vsel %vm166, %v137, 0.0
      %v200 = vadd.f32 %v198, %v199
      %v201 = vsel %vm166, %v139, 0.0
      %v202 = vadd.f32 %v200, %v201
      %v203 = vsel %vm166, %v141, 0.0
      %v204 = vadd.f32 %v202, %v203
      %v205 = vsel %vm166, %v143, 0.0
      %v206 = vadd.f32 %v204, %v205
      %v207 = vsel %vm166, %v145, 0.0
      %v208 = vadd.f32 %v206, %v207
      %v209 = vsel %vm166, %v147, 0.0
      %v210 = vadd.f32 %v208, %v209
      %v211 = vsel %vm166, %v149, 0.0
      %v212 = vadd.f32 %v210, %v211
      %v213 = vsel %vm166, %v151, 0.0
      %v214 = vadd.f32 %v212, %v213
      %v215 = vsel %vm166, %v153, 0.0
      %v216 = vadd.f32 %v214, %v215
      %v217 = vsel %vm166, %v155, 0.0
      %v218 = vadd.f32 %v216, %v217
      %v219 = vsel %vm166, %v157, 0.0
      %v220 = vadd.f32 %v218, %v219
      %v221 = vsel %vm166, %v159, 0.0
      %v222 = vadd.f32 %v220, %v221
      %v223 = vsel %vm166, %v161, 0.0
      %v224 = vadd.f32 %v222, %v223
      %v225 = vsel %vm166, %v163, 0.0
      %v226 = vadd.f32 %v224, %v225
      %v227 = vsel %vm166, %v165, 0.0
      %v228 = vadd.f32 %v226, %v227
      %v229 = vmul.f32 %v134, %v134
      %v230 = vmul.f32 %v135, %v135
      %v231 = vmul.f32 %v136, %v136
      %v232 = vmul.f32 %v137, %v137
      %v233 = vmul.f32 %v138, %v138
      %v234 = vmul.f32 %v139, %v139
      %v235 = vmul.f32 %v140, %v140
      %v236 = vmul.f32 %v141, %v141
      %v237 = vmul.f32 %v142, %v142
      %v238 = vmul.f32 %v143, %v143
      %v239 = vmul.f32 %v144, %v144
      %v240 = vmul.f32 %v145, %v145
      %v241 = vmul.f32 %v146, %v146
      %v242 = vmul.f32 %v147, %v147
      %v243 = vmul.f32 %v148, %v148
      %v244 = vmul.f32 %v149, %v149
      %v245 = vmul.f32 %v150, %v150
      %v246 = vmul.f32 %v151, %v151
      %v247 = vmul.f32 %v152, %v152
      %v248 = vmul.f32 %v153, %v153
      %v249 = vmul.f32 %v154, %v154
      %v250 = vmul.f32 %v155, %v155
      %v251 = vmul.f32 %v156, %v156
      %v252 = vmul.f32 %v157, %v157
      %v253 = vmul.f32 %v158, %v158
      %v254 = vmul.f32 %v159, %v159
      %v255 = vmul.f32 %v160, %v160
      %v256 = vmul.f32 %v161, %v161
      %v257 = vmul.f32 %v162, %v162
      %v258 = vmul.f32 %v163, %v163
      %v259 = vmul.f32 %v164, %v164
      %v260 = vmul.f32 %v165, %v165
      %v261 = vsel %vm166, %v229, 0.0
      %v262 = vsel %vm166, %v231, 0.0
      %v263 = vadd.f32 %v261, %v262
      %v264 = vsel %vm166, %v233, 0.0
      %v265 = vadd.f32 %v263, %v264
      %v266 = vsel %vm166, %v235, 0.0
      %v267 = vadd.f32 %v265, %v266
      %v268 = vsel %vm166, %v237, 0.0
      %v269 = vadd.f32 %v267, %v268
      %v270 = vsel %vm166, %v239, 0.0
      %v271 = vadd.f32 %v269, %v270
      %v272 = vsel %vm166, %v241, 0.0
      %v273 = vadd.f32 %v271, %v272
      %v274 = vsel %vm166, %v243, 0.0
      %v275 = vadd.f32 %v273, %v274
      %v276 = vsel %vm166, %v245, 0.0
      %v277 = vadd.f32 %v275, %v276
      %v278 = vsel %vm166, %v247, 0.0
      %v279 = vadd.f32 %v277, %v278
      %v280 = vsel %vm166, %v249, 0.0
      %v281 = vadd.f32 %v279, %v280
      %v282 = vsel %vm166, %v251, 0.0
      %v283 = vadd.f32 %v281, %v282
      %v284 = vsel %vm166, %v253, 0.0
      %v285 = vadd.f32 %v283, %v284
      %v286 = vsel %vm166, %v255, 0.0
      %v287 = vadd.f32 %v285, %v286
      %v288 = vsel %vm166, %v257, 0.0
      %v289 = vadd.f32 %v287, %v288
      %v290 = vsel %vm166, %v259, 0.0
      %v291 = vadd.f32 %v289, %v290
      %v292 = vsel %vm166, %v230, 0.0
      %v293 = vsel %vm166, %v232, 0.0
      %v294 = vadd.f32 %v292, %v293
      %v295 = vsel %vm166, %v234, 0.0
      %v296 = vadd.f32 %v294, %v295
      %v297 = vsel %vm166, %v236, 0.0
      %v298 = vadd.f32 %v296, %v297
      %v299 = vsel %vm166, %v238, 0.0
      %v300 = vadd.f32 %v298, %v299
      %v301 = vsel %vm166, %v240, 0.0
      %v302 = vadd.f32 %v300, %v301
      %v303 = vsel %vm166, %v242, 0.0
      %v304 = vadd.f32 %v302, %v303
      %v305 = vsel %vm166, %v244, 0.0
      %v306 = vadd.f32 %v304, %v305
      %v307 = vsel %vm166, %v246, 0.0
      %v308 = vadd.f32 %v306, %v307
      %v309 = vsel %vm166, %v248, 0.0
      %v310 = vadd.f32 %v308, %v309
      %v311 = vsel %vm166, %v250, 0.0
      %v312 = vadd.f32 %v310, %v311
      %v313 = vsel %vm166, %v252, 0.0
      %v314 = vadd.f32 %v312, %v313
      %v315 = vsel %vm166, %v254, 0.0
      %v316 = vadd.f32 %v314, %v315
      %v317 = vsel %vm166, %v256, 0.0
      %v318 = vadd.f32 %v316, %v317
      %v319 = vsel %vm166, %v258, 0.0
      %v320 = vadd.f32 %v318, %v319
      %v321 = vsel %vm166, %v260, 0.0
      %v322 = vadd.f32 %v320, %v321
      %v323 = vld [vmem:[%s1] sm:$0x1]
      %v324 = vsel %vm166, %v197, 0.0
      %v325 = vsel %vm166, %v228, 0.0
      %v326 = vadd.f32 %v324, %v325
      %v327 = vrot.slane %v326, 4
      %v328 = vadd.f32 %v326, %v327
      %v329 = vrot.slane %v328, 2
      %v330 = vadd.f32 %v328, %v329
      %v331 = vrot.slane %v330, 1
      %v332 = vadd.f32 %v330, %v331
      %v333 = vadd.f32 %v323, %v332
      %vm334 = vcmask 24576
      %335 = vst.msk [vmem:[%s1] sm:$0x1] %vm334, %v333
      %v336 = vld [vmem:[%s2] sm:$0x1]
      %v337 = vsel %vm166, %v291, 0.0
      %v338 = vsel %vm166, %v322, 0.0
      %v339 = vadd.f32 %v337, %v338
      %v340 = vrot.slane %v339, 4
      %v341 = vadd.f32 %v339, %v340
      %v342 = vrot.slane %v341, 2
      %v343 = vadd.f32 %v341, %v342
      %v344 = vrot.slane %v343, 1
      %v345 = vadd.f32 %v343, %v344
      %v346 = vadd.f32 %v336, %v345
      %347 = vst.msk [vmem:[%s2] sm:$0x1] %vm334, %v346
      // Predicated region
      $region29: #{conv2d_module_forward.2} parent=23 // pred_check
        %p348 = pneg %p53
      $region30: #{conv2d_module_forward.2} parent=23 // pred_check_branch
        %350 = sbr.rel (%p348) target = $region32
      $region31: #{conv2d_module_forward.2} parent=23 // pred_region
        _
      $region32: #{conv2d_module_forward.2} parent=23 // pred_fallthru
        _
      // Predicated region
      $region33: #{conv2d_module_forward.2} parent=23 // pred_check
        %p351 = pneg %p74
      $region34: #{conv2d_module_forward.2} parent=23 // pred_check_branch
        %353 = sbr.rel (%p351) target = $region36
      $region35: #{conv2d_module_forward.2} parent=23 // pred_region
        _
      $region36: #{conv2d_module_forward.2} parent=23 // pred_fallthru
        _
      // Predicated region
      $region37: #{conv2d_module_forward.2} parent=23 // pred_check
        %p354 = pneg %p53
      $region38: #{conv2d_module_forward.2} parent=23 // pred_check_branch
        %356 = sbr.rel (%p354) target = $region40
      $region39: #{conv2d_module_forward.2} parent=23 // pred_region
        _
      $region40: #{conv2d_module_forward.2} parent=23 // pred_fallthru
        _
      // Predicated region
      $region41: #{conv2d_module_forward.2} parent=23 // pred_check
        %p357 = pneg %p74
      $region42: #{conv2d_module_forward.2} parent=23 // pred_check_branch
        %359 = sbr.rel (%p357) target = $region44
      $region43: #{conv2d_module_forward.2} parent=23 // pred_region
        _
      $region44: #{conv2d_module_forward.2} parent=23 // pred_fallthru
        _
    $region24: #{conv2d_module_forward.2} parent=5 // pred_fallthru
      _
    %p360 = scmp.le.s32.totalorder 2, %s9
    // Predicated region
    $region45: #{conv2d_module_forward.2} parent=5 // pred_check
      %p361 = pneg %p360
    $region46: #{conv2d_module_forward.2} parent=5 // pred_check_branch
      %363 = sbr.rel (%p361) target = $region48
    $region47: #{conv2d_module_forward.2} parent=5 // pred_region
      %s364 = ssub.s32 %s9, 2
    $region48: #{conv2d_module_forward.2} parent=5 // pred_fallthru
      _
  $region6: #{conv2d_module_forward.2} parent=0 // loop_footer
    %s13 = sadd.s32 1, %s9
  $region7: #{conv2d_module_forward.2} parent=0 // loop_footer_branch
    %8 = sbr.rel target = $region3
  $region8: #{conv2d_module_forward.2} parent=0 // loop_exit
    _

// kernel: conv2d_module_forward.3
$region0: #{conv2d_module_forward.3}
  #allocation0 [shape = 'u32[]', space=smem, size = 0x4, offset = 0x4, fixed_abs, tag = 'smem constant byte address 0x4 - core index']
  #allocation1 [shape = 'u32[144,128]{1,0:T(1,128)}', space=vmem, size = 0x12000, scoped, tag = 'internal scratch']
  #allocation2 [shape = 'f32[18,25,4]{2,1,0:T(8,128)}', space=vmem, size = 0x48000, scoped, tag = 'scratch operand']
  %s0 = inlined_call_operand.vmem [shape: f32[2,16,16,4], index: 0, kind: input, shape index: {}]
  %s1 = inlined_call_operand.vmem [shape: f32[1,4], index: 1, kind: input, shape index: {}]
  %s2 = inlined_call_operand.vmem [shape: f32[1,4], index: 2, kind: input, shape index: {}]
  %s3 = inlined_call_operand.vmem [shape: bf16[36,128], index: 3, kind: input, shape index: {}]
  %s4 = inlined_call_operand.vmem [shape: f32[1,128], index: 4, kind: input, shape index: {}]
  %s5 = inlined_call_operand.vmem [shape: f32[2,16,16,128], index: 5, kind: output, shape index: {}]
  %s6 = sld [smem:[#allocation0]]
  $region57: #{conv2d_module_forward.3} parent=0
    _
  %s8 = ssub.s32 1, %s6
  %s9 = scalar_select 0, %s8, %s6
  loop: start=0, step=1, limit=6
  $region2: #{conv2d_module_forward.3} parent=0 // loop_pre_header
    _
  $region3: #{conv2d_module_forward.3} parent=0 // loop_header
    %s11 = sphi 0, %s15
    %p12 = scmp.ge.s32.totalorder %s11, 6
    %s18 = sphi 0, %s30
    %s19 = sphi 0, %s26
    %s20 = sphi 0, %s18
    %s21 = sphi 0, %s19
    %s22 = sphi 0, %s20
    %s23 = sphi 0, %s21
    %s33 = sphi 0, %s35
    %s36 = sphi 0, %s33
    %s37 = sphi 0, %s36
    %s53 = sphi 0, %s37
    %s57 = sphi 0, %s57
    %s59 = sphi 0, %s57
    %s60 = sphi 0, %s59
    %s74 = sphi 0, %s60
    %s78 = sphi 0, %s78
    %s80 = sphi 0, %s78
    %s81 = sphi 0, %s80
    %s95 = sphi 0, %s81
    %s99 = sphi 0, %s99
    %s101 = sphi 0, %s99
    %s102 = sphi 0, %s101
    %s116 = sphi 0, %s102
    %s120 = sphi 0, %s120
    %s122 = sphi 0, %s120
    %s123 = sphi 0, %s122
    %s137 = sphi 0, %s123
    %s145 = sphi 0, %s147
    %s148 = sphi 0, %s145
    %s149 = sphi 0, %s148
    %s165 = sphi 0, %s149
  $region4: #{conv2d_module_forward.3} parent=0 // loop_header_branch
    %14 = sbr.rel (%p12) target = $region8
  $region5: #{conv2d_module_forward.3} parent=0 // loop_body
    %s16 = ssub.s32 %s11, 1
    %s17 = ssub.s32 %s11, 2
    %s24 = sadd.s32 1, %s19
    %p25 = scmp.ge.s32.totalorder %s24, 2
    %s26 = scalar_select %p25, 0, %s24
    %s27 = sadd.s32 1, %s18
    %s28 = scalar_select %p25, %s27, %s18
    %p29 = scmp.ge.s32.totalorder %s28, 2
    %s30 = scalar_select %p29, 0, %s28
    %s31 = ssub.s32 %s18, %s30
    %p32 = scmp.eq.s32.totalorder %s31, 0
    %s34 = sadd.s32 %s33, 1
    %s35 = scalar_select %p32, %s33, %s34
    %p38 = pneg %p32
    %p39 = scmp.eq.s32.totalorder %s11, 3
    %p40 = por %p38, %p39
    %p41 = scmp.ne.s32.totalorder %s33, %s36
    %p42 = scmp.eq.s32.totalorder %s11, 0
    %p43 = por %p41, %p42
    %p44 = scmp.ne.s32.totalorder %s33, %s36
    %p45 = scmp.eq.s32.totalorder %s16, 3
    %p46 = por %p44, %p45
    %p47 = scmp.ne.s32.totalorder %s36, %s37
    %p48 = scmp.eq.s32.totalorder %s16, 0
    %p49 = por %p47, %p48
    %p50 = scmp.ne.s32.totalorder %s36, %s37
    %p51 = scmp.eq.s32.totalorder %s17, 3
    %p52 = por %p50, %p51
    %p54 = scmp.ne.s32.totalorder %s37, %s53
    %p55 = scmp.eq.s32.totalorder %s17, 0
    %p56 = por %p54, %p55
    %s58 = sadd.s32 %s57, 1
    %p61 = scmp.eq.s32.totalorder %s11, 3
    %p62 = scmp.ne.s32.totalorder %s57, %s59
    %p63 = scmp.eq.s32.totalorder %s11, 0
    %p64 = por %p62, %p63
    %p65 = scmp.ne.s32.totalorder %s57, %s59
    %p66 = scmp.eq.s32.totalorder %s16, 3
    %p67 = por %p65, %p66
    %p68 = scmp.ne.s32.totalorder %s59, %s60
    %p69 = scmp.eq.s32.totalorder %s16, 0
    %p70 = por %p68, %p69
    %p71 = scmp.ne.s32.totalorder %s59, %s60
    %p72 = scmp.eq.s32.totalorder %s17, 3
    %p73 = por %p71, %p72
    %p75 = scmp.ne.s32.totalorder %s60, %s74
    %p76 = scmp.eq.s32.totalorder %s17, 0
    %p77 = por %p75, %p76
    %s79 = sadd.s32 %s78, 1
    %p82 = scmp.eq.s32.totalorder %s11, 3
    %p83 = scmp.ne.s32.totalorder %s78, %s80
    %p84 = scmp.eq.s32.totalorder %s11, 0
    %p85 = por %p83, %p84
    %p86 = scmp.ne.s32.totalorder %s78, %s80
    %p87 = scmp.eq.s32.totalorder %s16, 3
    %p88 = por %p86, %p87
    %p89 = scmp.ne.s32.totalorder %s80, %s81
    %p90 = scmp.eq.s32.totalorder %s16, 0
    %p91 = por %p89, %p90
    %p92 = scmp.ne.s32.totalorder %s80, %s81
    %p93 = scmp.eq.s32.totalorder %s17, 3
    %p94 = por %p92, %p93
    %p96 = scmp.ne.s32.totalorder %s81, %s95
    %p97 = scmp.eq.s32.totalorder %s17, 0
    %p98 = por %p96, %p97
    %s100 = sadd.s32 %s99, 1
    %p103 = scmp.eq.s32.totalorder %s11, 3
    %p104 = scmp.ne.s32.totalorder %s99, %s101
    %p105 = scmp.eq.s32.totalorder %s11, 0
    %p106 = por %p104, %p105
    %p107 = scmp.ne.s32.totalorder %s99, %s101
    %p108 = scmp.eq.s32.totalorder %s16, 3
    %p109 = por %p107, %p108
    %p110 = scmp.ne.s32.totalorder %s101, %s102
    %p111 = scmp.eq.s32.totalorder %s16, 0
    %p112 = por %p110, %p111
    %p113 = scmp.ne.s32.totalorder %s101, %s102
    %p114 = scmp.eq.s32.totalorder %s17, 3
    %p115 = por %p113, %p114
    %p117 = scmp.ne.s32.totalorder %s102, %s116
    %p118 = scmp.eq.s32.totalorder %s17, 0
    %p119 = por %p117, %p118
    %s121 = sadd.s32 %s120, 1
    %p124 = scmp.eq.s32.totalorder %s11, 3
    %p125 = scmp.ne.s32.totalorder %s120, %s122
    %p126 = scmp.eq.s32.totalorder %s11, 0
    %p127 = por %p125, %p126
    %p128 = scmp.ne.s32.totalorder %s120, %s122
    %p129 = scmp.eq.s32.totalorder %s16, 3
    %p130 = por %p128, %p129
    %p131 = scmp.ne.s32.totalorder %s122, %s123
    %p132 = scmp.eq.s32.totalorder %s16, 0
    %p133 = por %p131, %p132
    %p134 = scmp.ne.s32.totalorder %s122, %s123
    %p135 = scmp.eq.s32.totalorder %s17, 3
    %p136 = por %p134, %p135
    %p138 = scmp.ne.s32.totalorder %s123, %s137
    %p139 = scmp.eq.s32.totalorder %s17, 0
    %p140 = por %p138, %p139
    %s141 = ssub.s32 %s18, %s30
    %s142 = ssub.s32 %s19, %s26
    %s143 = sor.u32 %s141, %s142
    %p144 = scmp.eq.s32.totalorder %s143, 0
    %s146 = sadd.s32 %s145, 1
    %s147 = scalar_select %p144, %s145, %s146
    %p150 = pneg %p144
    %p151 = scmp.eq.s32.totalorder %s11, 3
    %p152 = por %p150, %p151
    %p153 = scmp.ne.s32.totalorder %s145, %s148
    %p154 = scmp.eq.s32.totalorder %s11, 0
    %p155 = por %p153, %p154
    %p156 = scmp.ne.s32.totalorder %s145, %s148
    %p157 = scmp.eq.s32.totalorder %s16, 3
    %p158 = por %p156, %p157
    %p159 = scmp.ne.s32.totalorder %s148, %s149
    %p160 = scmp.eq.s32.totalorder %s16, 0
    %p161 = por %p159, %p160
    %p162 = scmp.ne.s32.totalorder %s148, %s149
    %p163 = scmp.eq.s32.totalorder %s17, 3
    %p164 = por %p162, %p163
    %p166 = scmp.ne.s32.totalorder %s149, %s165
    %p167 = scmp.eq.s32.totalorder %s17, 0
    %p168 = por %p166, %p167
    %p169 = scmp.le.s32.totalorder 1, %s11
    %p170 = scmp.lt.s32.totalorder %s11, 5
    %p171 = pnand %p169, %p170
    %p172 = pneg %p171
    // Predicated region
    $region9: #{conv2d_module_forward.3} parent=5 // pred_check
      _
    $region10: #{conv2d_module_forward.3} parent=5 // pred_check_branch
      %174 = sbr.rel (%p171) target = $region12
    $region11: #{conv2d_module_forward.3} parent=5 // pred_region
      %s175 = ssub.s32 %s11, 1
      // Predicated region
      $region13: #{conv2d_module_forward.3} parent=11 // pred_check
        %p176 = pneg %p70
      $region14: #{conv2d_module_forward.3} parent=11 // pred_check_branch
        %178 = sbr.rel (%p176) target = $region16
      $region15: #{conv2d_module_forward.3} parent=11 // pred_region
        _
      $region16: #{conv2d_module_forward.3} parent=11 // pred_fallthru
        _
      // Predicated region
      $region17: #{conv2d_module_forward.3} parent=11 // pred_check
        %p179 = pneg %p91
      $region18: #{conv2d_module_forward.3} parent=11 // pred_check_branch
        %181 = sbr.rel (%p179) target = $region20
      $region19: #{conv2d_module_forward.3} parent=11 // pred_region
        _
      $region20: #{conv2d_module_forward.3} parent=11 // pred_fallthru
        _
      // Predicated region
      $region21: #{conv2d_module_forward.3} parent=11 // pred_check
        %p182 = pneg %p112
      $region22: #{conv2d_module_forward.3} parent=11 // pred_check_branch
        %184 = sbr.rel (%p182) target = $region24
      $region23: #{conv2d_module_forward.3} parent=11 // pred_region
        _
      $region24: #{conv2d_module_forward.3} parent=11 // pred_fallthru
        _
      // Predicated region
      $region25: #{conv2d_module_forward.3} parent=11 // pred_check
        %p185 = pneg %p133
      $region26: #{conv2d_module_forward.3} parent=11 // pred_check_branch
        %187 = sbr.rel (%p185) target = $region28
      $region27: #{conv2d_module_forward.3} parent=11 // pred_region
        _
      $region28: #{conv2d_module_forward.3} parent=11 // pred_fallthru
        _
    $region12: #{conv2d_module_forward.3} parent=5 // pred_fallthru
      _
    %p188 = scmp.lt.s32.totalorder %s11, 4
    // Predicated region
    $region29: #{conv2d_module_forward.3} parent=5 // pred_check
      %p189 = pneg %p188
    $region30: #{conv2d_module_forward.3} parent=5 // pred_check_branch
      %191 = sbr.rel (%p189) target = $region32
    $region31: #{conv2d_module_forward.3} parent=5 // pred_region
      // Predicated region
      $region33: #{conv2d_module_forward.3} parent=31 // pred_check
        %p192 = pneg %p43
      $region34: #{conv2d_module_forward.3} parent=31 // pred_check_branch
        %194 = sbr.rel (%p192) target = $region36
      $region35: #{conv2d_module_forward.3} parent=31 // pred_region
        %p195 = scmp.lt.s32.totalorder %s18, 1
        %s196 = scalar_select %p195, %s18, 1
        %s197 = smul.addr %s196, 32
        %s198 = smul.addr %s197, 8
        %s199 = scalar_lea.vmem %s0, %s198
      $region36: #{conv2d_module_forward.3} parent=31 // pred_fallthru
        _
    $region32: #{conv2d_module_forward.3} parent=5 // pred_fallthru
      _
    %p200 = scmp.le.s32.totalorder 1, %s11
    %p201 = scmp.lt.s32.totalorder %s11, 5
    %p202 = pnand %p200, %p201
    %p203 = pneg %p202
    // Predicated region
    $region37: #{conv2d_module_forward.3} parent=5 // pred_check
      _
    $region38: #{conv2d_module_forward.3} parent=5 // pred_check_branch
      %205 = sbr.rel (%p202) target = $region40
    $region39: #{conv2d_module_forward.3} parent=5 // pred_region
      %s206 = ssub.s32 %s11, 1
      %p207 = scmp.lt.s32.totalorder %s20, 1
      %s208 = scalar_select %p207, %s20, 1
      %s209 = smul.addr %s208, 32
      %s210 = smul.addr %s209, 8
      %s211 = scalar_lea.vmem %s0, %s210
      %p212 = pneg %p49
      %p213 = pneg %p46
      %p214 = pneg %p70
      %p215 = pneg %p67
      %p216 = pneg %p91
      %p217 = pneg %p88
      %p218 = pneg %p112
      %p219 = pneg %p109
      %p220 = pneg %p133
      %p221 = pneg %p130
      %p222 = pneg %p161
      %p223 = pneg %p158
      %s224 = smul.u32 8, %s21
      %p225 = scmp.lt.s32.totalorder %s20, 1
      %s226 = scalar_select %p225, %s20, 1
      %p227 = scmp.lt.s32.totalorder %s224, 15
      %s228 = scalar_select %p227, %s224, 15
      %s229 = smul.addr %s228, 2
      %s230 = smul.addr %s226, 32
      %s231 = sadd.s32 %s229, %s230
      %s232 = smul.addr %s231, 8
      %s233 = scalar_lea.vmem %s5, %s232
      %p234 = scmp.lt.s32.totalorder %s20, 1
      %s235 = scalar_select %p234, %s20, 1
      %s236 = smul.addr %s235, 32
      %s237 = smul.addr %s236, 8
      %s238 = scalar_lea.vmem %s0, %s237
      %s239 = smul.u32 8, %s21
      %p240 = scmp.lt.s32.totalorder %s20, 1
      %s241 = scalar_select %p240, %s20, 1
      %p242 = scmp.lt.s32.totalorder %s239, 15
      %s243 = scalar_select %p242, %s239, 15
      %s244 = smul.addr %s243, 2
      %s245 = smul.addr %s241, 32
      %s246 = sadd.s32 %s244, %s245
      %s247 = smul.addr %s246, 8
      %s248 = scalar_lea.vmem %s5, %s247
      %s249 = smul.u32 8, %s21
      %p251 = scmp.eq.s32.totalorder %s21, 0
      // Predicated region
      $region41: #{conv2d_module_forward.3} parent=39 // pred_check
        %p252 = pneg %p251
      $region42: #{conv2d_module_forward.3} parent=39 // pred_check_branch
        %254 = sbr.rel (%p252) target = $region44
      $region43: #{conv2d_module_forward.3} parent=39 // pred_region
        %vm255 = vcmask 31744
        %256 = vst.msk [vmem:[#allocation2] sm:$0xff] %vm255, 0.0
        %257 = vst.msk [vmem:[#allocation2 + $0x8] sm:$0xff] %vm255, 0.0
        %258 = vst.msk [vmem:[#allocation2 + $0x10] sm:$0xff] %vm255, 0.0
        %vm259 = vcmask 24576
        %260 = vst.msk [vmem:[#allocation2 + $0x18] sm:$0x1] %vm259, 0.0
        %261 = vst.msk [vmem:[#allocation2 + $0x20] sm:$0xff] %vm255, 0.0
        %262 = vst.msk [vmem:[#allocation2 + $0x28] sm:$0xff] %vm255, 0.0
        %263 = vst.msk [vmem:[#allocation2 + $0x30] sm:$0xff] %vm255, 0.0
        %264 = vst.msk [vmem:[#allocation2 + $0x38] sm:$0x1] %vm259, 0.0
        %265 = vst.msk [vmem:[#allocation2 + $0x40] sm:$0xff] %vm255, 0.0
        %266 = vst.msk [vmem:[#allocation2 + $0x48] sm:$0xff] %vm255, 0.0
        %267 = vst.msk [vmem:[#allocation2 + $0x50] sm:$0xff] %vm255, 0.0
        %268 = vst.msk [vmem:[#allocation2 + $0x58] sm:$0x1] %vm259, 0.0
        %269 = vst.msk [vmem:[#allocation2 + $0x60] sm:$0xff] %vm255, 0.0
        %270 = vst.msk [vmem:[#allocation2 + $0x68] sm:$0xff] %vm255, 0.0
        %271 = vst.msk [vmem:[#allocation2 + $0x70] sm:$0xff] %vm255, 0.0
        %272 = vst.msk [vmem:[#allocation2 + $0x78] sm:$0x1] %vm259, 0.0
        %273 = vst.msk [vmem:[#allocation2 + $0x80] sm:$0xff] %vm255, 0.0
        %274 = vst.msk [vmem:[#allocation2 + $0x88] sm:$0xff] %vm255, 0.0
        %275 = vst.msk [vmem:[#allocation2 + $0x90] sm:$0xff] %vm255, 0.0
        %276 = vst.msk [vmem:[#allocation2 + $0x98] sm:$0x1] %vm259, 0.0
        %277 = vst.msk [vmem:[#allocation2 + $0xa0] sm:$0xff] %vm255, 0.0
        %278 = vst.msk [vmem:[#allocation2 + $0xa8] sm:$0xff] %vm255, 0.0
        %279 = vst.msk [vmem:[#allocation2 + $0xb0] sm:$0xff] %vm255, 0.0
        %280 = vst.msk [vmem:[#allocation2 + $0xb8] sm:$0x1] %vm259, 0.0
        %281 = vst.msk [vmem:[#allocation2 + $0xc0] sm:$0xff] %vm255, 0.0
        %282 = vst.msk [vmem:[#allocation2 + $0xc8] sm:$0xff] %vm255, 0.0
        %283 = vst.msk [vmem:[#allocation2 + $0xd0] sm:$0xff] %vm255, 0.0
        %284 = vst.msk [vmem:[#allocation2 + $0xd8] sm:$0x1] %vm259, 0.0
        %285 = vst.msk [vmem:[#allocation2 + $0xe0] sm:$0xff] %vm255, 0.0
        %286 = vst.msk [vmem:[#allocation2 + $0xe8] sm:$0xff] %vm255, 0.0
        %287 = vst.msk [vmem:[#allocation2 + $0xf0] sm:$0xff] %vm255, 0.0
        %288 = vst.msk [vmem:[#allocation2 + $0xf8] sm:$0x1] %vm259, 0.0
        %289 = vst.msk [vmem:[#allocation2 + $0x100] sm:$0xff] %vm255, 0.0
        %290 = vst.msk [vmem:[#allocation2 + $0x108] sm:$0xff] %vm255, 0.0
        %291 = vst.msk [vmem:[#allocation2 + $0x110] sm:$0xff] %vm255, 0.0
        %292 = vst.msk [vmem:[#allocation2 + $0x118] sm:$0x1] %vm259, 0.0
        %293 = vst.msk [vmem:[#allocation2 + $0x120] sm:$0xff] %vm255, 0.0
        %294 = vst.msk [vmem:[#allocation2 + $0x128] sm:$0xff] %vm255, 0.0
        %295 = vst.msk [vmem:[#allocation2 + $0x130] sm:$0xff] %vm255, 0.0
        %296 = vst.msk [vmem:[#allocation2 + $0x138] sm:$0x1] %vm259, 0.0
        %297 = vst.msk [vmem:[#allocation2 + $0x140] sm:$0xff] %vm255, 0.0
        %298 = vst.msk [vmem:[#allocation2 + $0x148] sm:$0xff] %vm255, 0.0
        %299 = vst.msk [vmem:[#allocation2 + $0x150] sm:$0xff] %vm255, 0.0
        %300 = vst.msk [vmem:[#allocation2 + $0x158] sm:$0x1] %vm259, 0.0
        %301 = vst.msk [vmem:[#allocation2 + $0x160] sm:$0xff] %vm255, 0.0
        %302 = vst.msk [vmem:[#allocation2 + $0x168] sm:$0xff] %vm255, 0.0
        %303 = vst.msk [vmem:[#allocation2 + $0x170] sm:$0xff] %vm255, 0.0
        %304 = vst.msk [vmem:[#allocation2 + $0x178] sm:$0x1] %vm259, 0.0
        %305 = vst.msk [vmem:[#allocation2 + $0x180] sm:$0xff] %vm255, 0.0
        %306 = vst.msk [vmem:[#allocation2 + $0x188] sm:$0xff] %vm255, 0.0
        %307 = vst.msk [vmem:[#allocation2 + $0x190] sm:$0xff] %vm255, 0.0
        %308 = vst.msk [vmem:[#allocation2 + $0x198] sm:$0x1] %vm259, 0.0
        %309 = vst.msk [vmem:[#allocation2 + $0x1a0] sm:$0xff] %vm255, 0.0
        %310 = vst.msk [vmem:[#allocation2 + $0x1a8] sm:$0xff] %vm255, 0.0
        %311 = vst.msk [vmem:[#allocation2 + $0x1b0] sm:$0xff] %vm255, 0.0
        %312 = vst.msk [vmem:[#allocation2 + $0x1b8] sm:$0x1] %vm259, 0.0
        %313 = vst.msk [vmem:[#allocation2 + $0x1c0] sm:$0xff] %vm255, 0.0
        %314 = vst.msk [vmem:[#allocation2 + $0x1c8] sm:$0xff] %vm255, 0.0
        %315 = vst.msk [vmem:[#allocation2 + $0x1d0] sm:$0xff] %vm255, 0.0
        %316 = vst.msk [vmem:[#allocation2 + $0x1d8] sm:$0x1] %vm259, 0.0
        %317 = vst.msk [vmem:[#allocation2 + $0x1e0] sm:$0xff] %vm255, 0.0
        %318 = vst.msk [vmem:[#allocation2 + $0x1e8] sm:$0xff] %vm255, 0.0
        %319 = vst.msk [vmem:[#allocation2 + $0x1f0] sm:$0xff] %vm255, 0.0
        %320 = vst.msk [vmem:[#allocation2 + $0x1f8] sm:$0x1] %vm259, 0.0
        %321 = vst.msk [vmem:[#allocation2 + $0x200] sm:$0xff] %vm255, 0.0
        %322 = vst.msk [vmem:[#allocation2 + $0x208] sm:$0xff] %vm255, 0.0
        %323 = vst.msk [vmem:[#allocation2 + $0x210] sm:$0xff] %vm255, 0.0
        %324 = vst.msk [vmem:[#allocation2 + $0x218] sm:$0x1] %vm259, 0.0
        %325 = vst.msk [vmem:[#allocation2 + $0x220] sm:$0xff] %vm255, 0.0
        %326 = vst.msk [vmem:[#allocation2 + $0x228] sm:$0xff] %vm255, 0.0
        %327 = vst.msk [vmem:[#allocation2 + $0x230] sm:$0xff] %vm255, 0.0
        %328 = vst.msk [vmem:[#allocation2 + $0x238] sm:$0x1] %vm259, 0.0
        %v329 = vld [vmem:[%s238] sm:$0xff]
        %v330 = vld [vmem:[%s238 + $0x8] sm:$0xff]
        %v331 = vld [vmem:[%s238 + $0x10] sm:$0xff]
        %v332 = vld [vmem:[%s238 + $0x18] sm:$0xff]
        %v333 = vld [vmem:[%s238 + $0x20] sm:$0xff]
        %v334 = vld [vmem:[%s238 + $0x28] sm:$0xff]
        %v335 = vld [vmem:[%s238 + $0x30] sm:$0xff]
        %v336 = vld [vmem:[%s238 + $0x38] sm:$0xff]
        %v337 = vld [vmem:[%s238 + $0x40] sm:$0xff]
        %v338 = vld [vmem:[%s238 + $0x48] sm:$0xff]
        %v339 = vld [vmem:[%s238 + $0x50] sm:$0xff]
        %v340 = vld [vmem:[%s238 + $0x58] sm:$0xff]
        %v341 = vld [vmem:[%s238 + $0x60] sm:$0xff]
        %v342 = vld [vmem:[%s238 + $0x68] sm:$0xff]
        %v343 = vld [vmem:[%s238 + $0x70] sm:$0xff]
        %v344 = vld [vmem:[%s238 + $0x78] sm:$0xff]
        %v345 = vld [vmem:[%s238 + $0x80] sm:$0xff]
        %v346 = vld [vmem:[%s238 + $0x88] sm:$0xff]
        %v347 = vld [vmem:[%s238 + $0x90] sm:$0xff]
        %v348 = vld [vmem:[%s238 + $0x98] sm:$0xff]
        %v349 = vld [vmem:[%s238 + $0xa0] sm:$0xff]
        %v350 = vld [vmem:[%s238 + $0xa8] sm:$0xff]
        %v351 = vld [vmem:[%s238 + $0xb0] sm:$0xff]
        %v352 = vld [vmem:[%s238 + $0xb8] sm:$0xff]
        %v353 = vld [vmem:[%s238 + $0xc0] sm:$0xff]
        %v354 = vld [vmem:[%s238 + $0xc8] sm:$0xff]
        %v355 = vld [vmem:[%s238 + $0xd0] sm:$0xff]
        %v356 = vld [vmem:[%s238 + $0xd8] sm:$0xff]
        %v357 = vld [vmem:[%s238 + $0xe0] sm:$0xff]
        %v358 = vld [vmem:[%s238 + $0xe8] sm:$0xff]
        %v359 = vld [vmem:[%s238 + $0xf0] sm:$0xff]
        %v360 = vld [vmem:[%s238 + $0xf8] sm:$0xff]
        %v361 = vld [vmem:[%s1] sm:$0x1]
        %v363 = vlaneseq
        %v364 = vshrl.u32 %v363, 7
        %v365 = vsub.s32 0, %v364
        %v366 = vrot.slane %v361, %v365
        %v368 = vmul.f32 %v329, %v366
        %v369 = vmul.f32 %v330, %v366
        %v370 = vmul.f32 %v331, %v366
        %v371 = vmul.f32 %v332, %v366
        %v372 = vmul.f32 %v333, %v366
        %v373 = vmul.f32 %v334, %v366
        %v374 = vmul.f32 %v335, %v366
        %v375 = vmul.f32 %v336, %v366
        %v376 = vmul.f32 %v337, %v366
        %v377 = vmul.f32 %v338, %v366
        %v378 = vmul.f32 %v339, %v366
        %v379 = vmul.f32 %v340, %v366
        %v380 = vmul.f32 %v341, %v366
        %v381 = vmul.f32 %v342, %v366
        %v382 = vmul.f32 %v343, %v366
        %v383 = vmul.f32 %v344, %v366
        %v384 = vmul.f32 %v345, %v366
        %v385 = vmul.f32 %v346, %v366
        %v386 = vmul.f32 %v347, %v366
        %v387 = vmul.f32 %v348, %v366
        %v388 = vmul.f32 %v349, %v366
        %v389 = vmul.f32 %v350, %v366
        %v390 = vmul.f32 %v351, %v366
        %v391 = vmul.f32 %v352, %v366
        %v392 = vmul.f32 %v353, %v366
        %v393 = vmul.f32 %v354, %v366
        %v394 = vmul.f32 %v355, %v366
        %v395 = vmul.f32 %v356, %v366
        %v396 = vmul.f32 %v357, %v366
        %v397 = vmul.f32 %v358, %v366
        %v398 = vmul.f32 %v359, %v366
        %v399 = vmul.f32 %v360, %v366
        %v400 = vld [vmem:[%s2] sm:$0x1]
        %v402 = vlaneseq
        %v403 = vshrl.u32 %v402, 7
        %v404 = vsub.s32 0, %v403
        %v405 = vrot.slane %v400, %v404
        %v407 = vadd.f32 %v368, %v405
        %v408 = vadd.f32 %v369, %v405
        %v409 = vadd.f32 %v370, %v405
        %v410 = vadd.f32 %v371, %v405
        %v411 = vadd.f32 %v372, %v405
        %v412 = vadd.f32 %v373, %v405
        %v413 = vadd.f32 %v374, %v405
        %v414 = vadd.f32 %v375, %v405
        %v415 = vadd.f32 %v376, %v405
        %v416 = vadd.f32 %v377, %v405
        %v417 = vadd.f32 %v378, %v405
        %v418 = vadd.f32 %v379, %v405
        %v419 = vadd.f32 %v380, %v405
        %v420 = vadd.f32 %v381, %v405
        %v421 = vadd.f32 %v382, %v405
        %v422 = vadd.f32 %v383, %v405
        %v423 = vadd.f32 %v384, %v405
        %v424 = vadd.f32 %v385, %v405
        %v425 = vadd.f32 %v386, %v405
        %v426 = vadd.f32 %v387, %v405
        %v427 = vadd.f32 %v388, %v405
        %v428 = vadd.f32 %v389, %v405
        %v429 = vadd.f32 %v390, %v405
        %v430 = vadd.f32 %v391, %v405
        %v431 = vadd.f32 %v392, %v405
        %v432 = vadd.f32 %v393, %v405
        %v433 = vadd.f32 %v394, %v405
        %v434 = vadd.f32 %v395, %v405
        %v435 = vadd.f32 %v396, %v405
        %v436 = vadd.f32 %v397, %v405
        %v437 = vadd.f32 %v398, %v405
        %v438 = vadd.f32 %v399, %v405
        %v439 = vmax.f32 %v407, 0.0
        %v440 = vmax.f32 %v408, 0.0
        %v441 = vmax.f32 %v409, 0.0
        %v442 = vmax.f32 %v410, 0.0
        %v443 = vmax.f32 %v411, 0.0
        %v444 = vmax.f32 %v412, 0.0
        %v445 = vmax.f32 %v413, 0.0
        %v446 = vmax.f32 %v414, 0.0
        %v447 = vmax.f32 %v415, 0.0
        %v448 = vmax.f32 %v416, 0.0
        %v449 = vmax.f32 %v417, 0.0
        %v450 = vmax.f32 %v418, 0.0
        %v451 = vmax.f32 %v419, 0.0
        %v452 = vmax.f32 %v420, 0.0
        %v453 = vmax.f32 %v421, 0.0
        %v454 = vmax.f32 %v422, 0.0
        %v455 = vmax.f32 %v423, 0.0
        %v456 = vmax.f32 %v424, 0.0
        %v457 = vmax.f32 %v425, 0.0
        %v458 = vmax.f32 %v426, 0.0
        %v459 = vmax.f32 %v427, 0.0
        %v460 = vmax.f32 %v428, 0.0
        %v461 = vmax.f32 %v429, 0.0
        %v462 = vmax.f32 %v430, 0.0
        %v463 = vmax.f32 %v431, 0.0
        %v464 = vmax.f32 %v432, 0.0
        %v465 = vmax.f32 %v433, 0.0
        %v466 = vmax.f32 %v434, 0.0
        %v467 = vmax.f32 %v435, 0.0
        %v468 = vmax.f32 %v436, 0.0
        %v469 = vmax.f32 %v437, 0.0
        %v470 = vmax.f32 %v438, 0.0
        %s471 = scalar_lea.vmem [#allocation2], 32
        %472 = vst.msk [vmem:[%s471 + $0x8] sm:$0xff] %vm255, %v439
        %473 = vst.msk [vmem:[%s471 + $0x10] sm:$0xff] %vm255, %v440
        %474 = vst.msk [vmem:[%s471 + $0x28] sm:$0xff] %vm255, %v441
        %475 = vst.msk [vmem:[%s471 + $0x30] sm:$0xff] %vm255, %v442
        %476 = vst.msk [vmem:[%s471 + $0x48] sm:$0xff] %vm255, %v443
        %477 = vst.msk [vmem:[%s471 + $0x50] sm:$0xff] %vm255, %v444
        %478 = vst.msk [vmem:[%s471 + $0x68] sm:$0xff] %vm255, %v445
        %479 = vst.msk [vmem:[%s471 + $0x70] sm:$0xff] %vm255, %v446
        %480 = vst.msk [vmem:[%s471 + $0x88] sm:$0xff] %vm255, %v447
        %481 = vst.msk [vmem:[%s471 + $0x90] sm:$0xff] %vm255, %v448
        %482 = vst.msk [vmem:[%s471 + $0xa8] sm:$0xff] %vm255, %v449
        %483 = vst.msk [vmem:[%s471 + $0xb0] sm:$0xff] %vm255, %v450
        %484 = vst.msk [vmem:[%s471 + $0xc8] sm:$0xff] %vm255, %v451
        %485 = vst.msk [vmem:[%s471 + $0xd0] sm:$0xff] %vm255, %v452
        %486 = vst.msk [vmem:[%s471 + $0xe8] sm:$0xff] %vm255, %v453
        %487 = vst.msk [vmem:[%s471 + $0xf0] sm:$0xff] %vm255, %v454
        %488 = vst.msk [vmem:[%s471 + $0x108] sm:$0xff] %vm255, %v455
        %489 = vst.msk [vmem:[%s471 + $0x110] sm:$0xff] %vm255, %v456
        %490 = vst.msk [vmem:[%s471 + $0x128] sm:$0xff] %vm255, %v457
        %491 = vst.msk [vmem:[%s471 + $0x130] sm:$0xff] %vm255, %v458
        %492 = vst.msk [vmem:[%s471 + $0x148] sm:$0xff] %vm255, %v459
        %493 = vst.msk [vmem:[%s471 + $0x150] sm:$0xff] %vm255, %v460
        %494 = vst.msk [vmem:[%s471 + $0x168] sm:$0xff] %vm255, %v461
        %495 = vst.msk [vmem:[%s471 + $0x170] sm:$0xff] %vm255, %v462
        %496 = vst.msk [vmem:[%s471 + $0x188] sm:$0xff] %vm255, %v463
        %497 = vst.msk [vmem:[%s471 + $0x190] sm:$0xff] %vm255, %v464
        %498 = vst.msk [vmem:[%s471 + $0x1a8] sm:$0xff] %vm255, %v465
        %499 = vst.msk [vmem:[%s471 + $0x1b0] sm:$0xff] %vm255, %v466
        %500 = vst.msk [vmem:[%s471 + $0x1c8] sm:$0xff] %vm255, %v467
        %501 = vst.msk [vmem:[%s471 + $0x1d0] sm:$0xff] %vm255, %v468
        %502 = vst.msk [vmem:[%s471 + $0x1e8] sm:$0xff] %vm255, %v469
        %503 = vst.msk [vmem:[%s471 + $0x1f0] sm:$0xff] %vm255, %v470
      $region44: #{conv2d_module_forward.3} parent=39 // pred_fallthru
        _
      %s504 = smul.u32 %s21, 8
      %s505 = smul.u32 %s504, 32
      %s506 = scalar_lea.vmem [#allocation2], %s505
      %v507 = vld [vmem:[%s506] sm:$0xff]
      %v508 = vld [vmem:[%s506 + $0x8] sm:$0xff]
      %v509 = vld [vmem:[%s506 + $0x10] sm:$0xff]
      %v510 = vld [vmem:[%s506 + $0x18] sm:$0x1]
      %v511 = vld [vmem:[%s506 + $0x20] sm:$0xff]
      %v512 = vld [vmem:[%s506 + $0x28] sm:$0xff]
      %v513 = vld [vmem:[%s506 + $0x30] sm:$0xff]
      %v514 = vld [vmem:[%s506 + $0x38] sm:$0x1]
      %v515 = vld [vmem:[%s506 + $0x40] sm:$0xff]
      %v516 = vld [vmem:[%s506 + $0x48] sm:$0xff]
      %v517 = vld [vmem:[%s506 + $0x50] sm:$0xff]
      %v518 = vld [vmem:[%s506 + $0x58] sm:$0x1]
      %v519 = vld [vmem:[%s506 + $0x60] sm:$0xff]
      %v520 = vld [vmem:[%s506 + $0x68] sm:$0xff]
      %v521 = vld [vmem:[%s506 + $0x70] sm:$0xff]
      %v522 = vld [vmem:[%s506 + $0x78] sm:$0x1]
      %v523 = vld [vmem:[%s506 + $0x80] sm:$0xff]
      %v524 = vld [vmem:[%s506 + $0x88] sm:$0xff]
      %v525 = vld [vmem:[%s506 + $0x90] sm:$0xff]
      %v526 = vld [vmem:[%s506 + $0x98] sm:$0x1]
      %v527 = vld [vmem:[%s506 + $0xa0] sm:$0xff]
      %v528 = vld [vmem:[%s506 + $0xa8] sm:$0xff]
      %v529 = vld [vmem:[%s506 + $0xb0] sm:$0xff]
      %v530 = vld [vmem:[%s506 + $0xb8] sm:$0x1]
      %v531 = vld [vmem:[%s506 + $0xc0] sm:$0xff]
      %v532 = vld [vmem:[%s506 + $0xc8] sm:$0xff]
      %v533 = vld [vmem:[%s506 + $0xd0] sm:$0xff]
      %v534 = vld [vmem:[%s506 + $0xd8] sm:$0x1]
      %v535 = vld [vmem:[%s506 + $0xe0] sm:$0xff]
      %v536 = vld [vmem:[%s506 + $0xe8] sm:$0xff]
      %v537 = vld [vmem:[%s506 + $0xf0] sm:$0xff]
      %v538 = vld [vmem:[%s506 + $0xf8] sm:$0x1]
      %v539 = vld [vmem:[%s506 + $0x100] sm:$0xff]
      %v540 = vld [vmem:[%s506 + $0x108] sm:$0xff]
      %v541 = vld [vmem:[%s506 + $0x110] sm:$0xff]
      %v542 = vld [vmem:[%s506 + $0x118] sm:$0x1]
      %v543 = vld [vmem:[%s506 + $0x120] sm:$0xff]
      %v544 = vld [vmem:[%s506 + $0x128] sm:$0xff]
      %v545 = vld [vmem:[%s506 + $0x130] sm:$0xff]
      %v546 = vld [vmem:[%s506 + $0x138] sm:$0x1]
      %vm563 = vcmask 1046528
      %v564 = vrot.slane %v508, 1
      %v565 = vrot.slane %v509, 1
      %v566 = vsel %vm563, %v564, %v565
      %v567 = vrot.slane %v512, 1
      %v568 = vrot.slane %v513, 1
      %v569 = vsel %vm563, %v567, %v568
      %v570 = vrot.slane %v516, 1
      %v571 = vrot.slane %v517, 1
      %v572 = vsel %vm563, %v570, %v571
      %v573 = vrot.slane %v520, 1
      %v574 = vrot.slane %v521, 1
      %v575 = vsel %vm563, %v573, %v574
      %v576 = vrot.slane %v524, 1
      %v577 = vrot.slane %v525, 1
      %v578 = vsel %vm563, %v576, %v577
      %v579 = vrot.slane %v528, 1
      %v580 = vrot.slane %v529, 1
      %v581 = vsel %vm563, %v579, %v580
      %v582 = vrot.slane %v532, 1
      %v583 = vrot.slane %v533, 1
      %v584 = vsel %vm563, %v582, %v583
      %v585 = vrot.slane %v536, 1
      %v586 = vrot.slane %v537, 1
      %v587 = vsel %vm563, %v585, %v586
      %588 = vrot.lane.b32.xlu0 %v564, 4
      %v589 = vpop.permute.xlu0 %588
      %590 = vrot.lane.b32.xlu0 %v566, 4
      %v591 = vpop.permute.xlu0 %590
      %592 = vrot.lane.b32.xlu0 %v565, 4
      %v593 = vpop.permute.xlu0 %592
      %594 = vrot.lane.b32.xlu0 %v567, 4
      %v595 = vpop.permute.xlu0 %594
      %596 = vrot.lane.b32.xlu0 %v569, 4
      %v597 = vpop.permute.xlu0 %596
      %598 = vrot.lane.b32.xlu0 %v568, 4
      %v599 = vpop.permute.xlu0 %598
      %600 = vrot.lane.b32.xlu0 %v570, 4
      %v601 = vpop.permute.xlu0 %600
      %602 = vrot.lane.b32.xlu0 %v572, 4
      %v603 = vpop.permute.xlu0 %602
      %604 = vrot.lane.b32.xlu0 %v571, 4
      %v605 = vpop.permute.xlu0 %604
      %606 = vrot.lane.b32.xlu0 %v573, 4
      %v607 = vpop.permute.xlu0 %606
      %608 = vrot.lane.b32.xlu0 %v575, 4
      %v609 = vpop.permute.xlu0 %608
      %610 = vrot.lane.b32.xlu0 %v574, 4
      %v611 = vpop.permute.xlu0 %610
      %612 = vrot.lane.b32.xlu0 %v576, 4
      %v613 = vpop.permute.xlu0 %612
      %614 = vrot.lane.b32.xlu0 %v578, 4
      %v615 = vpop.permute.xlu0 %614
      %616 = vrot.lane.b32.xlu0 %v577, 4
      %v617 = vpop.permute.xlu0 %616
      %618 = vrot.lane.b32.xlu0 %v579, 4
      %v619 = vpop.permute.xlu0 %618
      %620 = vrot.lane.b32.xlu0 %v581, 4
      %v621 = vpop.permute.xlu0 %620
      %622 = vrot.lane.b32.xlu0 %v580, 4
      %v623 = vpop.permute.xlu0 %622
      %624 = vrot.lane.b32.xlu0 %v582, 4
      %v625 = vpop.permute.xlu0 %624
      %626 = vrot.lane.b32.xlu0 %v584, 4
      %v627 = vpop.permute.xlu0 %626
      %628 = vrot.lane.b32.xlu0 %v583, 4
      %v629 = vpop.permute.xlu0 %628
      %630 = vrot.lane.b32.xlu0 %v585, 4
      %v631 = vpop.permute.xlu0 %630
      %632 = vrot.lane.b32.xlu0 %v587, 4
      %v633 = vpop.permute.xlu0 %632
      %634 = vrot.lane.b32.xlu0 %v586, 4
      %v635 = vpop.permute.xlu0 %634
      %vm668 = vcmask 1045504
      %v669 = vrot.slane %v508, 2
      %v670 = vrot.slane %v509, 2
      %v671 = vsel %vm668, %v669, %v670
      %v672 = vrot.slane %v510, 2
      %v673 = vsel %vm668, %v670, %v672
      %v674 = vrot.slane %v512, 2
      %v675 = vrot.slane %v513, 2
      %v676 = vsel %vm668, %v674, %v675
      %v677 = vrot.slane %v514, 2
      %v678 = vsel %vm668, %v675, %v677
      %v679 = vrot.slane %v516, 2
      %v680 = vrot.slane %v517, 2
      %v681 = vsel %vm668, %v679, %v680
      %v682 = vrot.slane %v518, 2
      %v683 = vsel %vm668, %v680, %v682
      %v684 = vrot.slane %v520, 2
      %v685 = vrot.slane %v521, 2
      %v686 = vsel %vm668, %v684, %v685
      %v687 = vrot.slane %v522, 2
      %v688 = vsel %vm668, %v685, %v687
      %v689 = vrot.slane %v524, 2
      %v690 = vrot.slane %v525, 2
      %v691 = vsel %vm668, %v689, %v690
      %v692 = vrot.slane %v526, 2
      %v693 = vsel %vm668, %v690, %v692
      %v694 = vrot.slane %v528, 2
      %v695 = vrot.slane %v529, 2
      %v696 = vsel %vm668, %v694, %v695
      %v697 = vrot.slane %v530, 2
      %v698 = vsel %vm668, %v695, %v697
      %v699 = vrot.slane %v532, 2
      %v700 = vrot.slane %v533, 2
      %v701 = vsel %vm668, %v699, %v700
      %v702 = vrot.slane %v534, 2
      %v703 = vsel %vm668, %v700, %v702
      %v704 = vrot.slane %v536, 2
      %v705 = vrot.slane %v537, 2
      %v706 = vsel %vm668, %v704, %v705
      %v707 = vrot.slane %v538, 2
      %v708 = vsel %vm668, %v705, %v707
      %709 = vrot.lane.b32.xlu0 %v669, 8
      %v710 = vpop.permute.xlu0 %709
      %711 = vrot.lane.b32.xlu0 %v671, 8
      %v712 = vpop.permute.xlu0 %711
      %713 = vrot.lane.b32.xlu0 %v673, 8
      %v714 = vpop.permute.xlu0 %713
      %715 = vrot.lane.b32.xlu0 %v674, 8
      %v716 = vpop.permute.xlu0 %715
      %717 = vrot.lane.b32.xlu0 %v676, 8
      %v718 = vpop.permute.xlu0 %717
      %719 = vrot.lane.b32.xlu0 %v678, 8
      %v720 = vpop.permute.xlu0 %719
      %721 = vrot.lane.b32.xlu0 %v679, 8
      %v722 = vpop.permute.xlu0 %721
      %723 = vrot.lane.b32.xlu0 %v681, 8
      %v724 = vpop.permute.xlu0 %723
      %725 = vrot.lane.b32.xlu0 %v683, 8
      %v726 = vpop.permute.xlu0 %725
      %727 = vrot.lane.b32.xlu0 %v684, 8
      %v728 = vpop.permute.xlu0 %727
      %729 = vrot.lane.b32.xlu0 %v686, 8
      %v730 = vpop.permute.xlu0 %729
      %731 = vrot.lane.b32.xlu0 %v688, 8
      %v732 = vpop.permute.xlu0 %731
      %733 = vrot.lane.b32.xlu0 %v689, 8
      %v734 = vpop.permute.xlu0 %733
      %735 = vrot.lane.b32.xlu0 %v691, 8
      %v736 = vpop.permute.xlu0 %735
      %737 = vrot.lane.b32.xlu0 %v693, 8
      %v738 = vpop.permute.xlu0 %737
      %739 = vrot.lane.b32.xlu0 %v694, 8
      %v740 = vpop.permute.xlu0 %739
      %741 = vrot.lane.b32.xlu0 %v696, 8
      %v742 = vpop.permute.xlu0 %741
      %743 = vrot.lane.b32.xlu0 %v698, 8
      %v744 = vpop.permute.xlu0 %743
      %745 = vrot.lane.b32.xlu0 %v699, 8
      %v746 = vpop.permute.xlu0 %745
      %747 = vrot.lane.b32.xlu0 %v701, 8
      %v748 = vpop.permute.xlu0 %747
      %749 = vrot.lane.b32.xlu0 %v703, 8
      %v750 = vpop.permute.xlu0 %749
      %751 = vrot.lane.b32.xlu0 %v704, 8
      %v752 = vpop.permute.xlu0 %751
      %753 = vrot.lane.b32.xlu0 %v706, 8
      %v754 = vpop.permute.xlu0 %753
      %755 = vrot.lane.b32.xlu0 %v708, 8
      %v756 = vpop.permute.xlu0 %755
      %791 = vrot.lane.b32.xlu0 %v511, 12
      %v792 = vpop.permute.xlu0 %791
      %793 = vrot.lane.b32.xlu0 %v512, 12
      %v794 = vpop.permute.xlu0 %793
      %795 = vrot.lane.b32.xlu0 %v513, 12
      %v796 = vpop.permute.xlu0 %795
      %797 = vrot.lane.b32.xlu0 %v515, 12
      %v798 = vpop.permute.xlu0 %797
      %799 = vrot.lane.b32.xlu0 %v516, 12
      %v800 = vpop.permute.xlu0 %799
      %801 = vrot.lane.b32.xlu0 %v517, 12
      %v802 = vpop.permute.xlu0 %801
      %803 = vrot.lane.b32.xlu0 %v519, 12
      %v804 = vpop.permute.xlu0 %803
      %805 = vrot.lane.b32.xlu0 %v520, 12
      %v806 = vpop.permute.xlu0 %805
      %807 = vrot.lane.b32.xlu0 %v521, 12
      %v808 = vpop.permute.xlu0 %807
      %809 = vrot.lane.b32.xlu0 %v523, 12
      %v810 = vpop.permute.xlu0 %809
      %811 = vrot.lane.b32.xlu0 %v524, 12
      %v812 = vpop.permute.xlu0 %811
      %813 = vrot.lane.b32.xlu0 %v525, 12
      %v814 = vpop.permute.xlu0 %813
      %815 = vrot.lane.b32.xlu0 %v527, 12
      %v816 = vpop.permute.xlu0 %815
      %817 = vrot.lane.b32.xlu0 %v528, 12
      %v818 = vpop.permute.xlu0 %817
      %819 = vrot.lane.b32.xlu0 %v529, 12
      %v820 = vpop.permute.xlu0 %819
      %821 = vrot.lane.b32.xlu0 %v531, 12
      %v822 = vpop.permute.xlu0 %821
      %823 = vrot.lane.b32.xlu0 %v532, 12
      %v824 = vpop.permute.xlu0 %823
      %825 = vrot.lane.b32.xlu0 %v533, 12
      %v826 = vpop.permute.xlu0 %825
      %827 = vrot.lane.b32.xlu0 %v535, 12
      %v828 = vpop.permute.xlu0 %827
      %829 = vrot.lane.b32.xlu0 %v536, 12
      %v830 = vpop.permute.xlu0 %829
      %831 = vrot.lane.b32.xlu0 %v537, 12
      %v832 = vpop.permute.xlu0 %831
      %833 = vrot.lane.b32.xlu0 %v539, 12
      %v834 = vpop.permute.xlu0 %833
      %835 = vrot.lane.b32.xlu0 %v540, 12
      %v836 = vpop.permute.xlu0 %835
      %837 = vrot.lane.b32.xlu0 %v541, 12
      %v838 = vpop.permute.xlu0 %837
      %v863 = vrot.slane %v540, 1
      %v864 = vrot.slane %v541, 1
      %v865 = vsel %vm563, %v863, %v864
      %866 = vrot.lane.b32.xlu0 %v567, 16
      %v867 = vpop.permute.xlu0 %866
      %868 = vrot.lane.b32.xlu0 %v569, 16
      %v869 = vpop.permute.xlu0 %868
      %870 = vrot.lane.b32.xlu0 %v568, 16
      %v871 = vpop.permute.xlu0 %870
      %872 = vrot.lane.b32.xlu0 %v570, 16
      %v873 = vpop.permute.xlu0 %872
      %874 = vrot.lane.b32.xlu0 %v572, 16
      %v875 = vpop.permute.xlu0 %874
      %876 = vrot.lane.b32.xlu0 %v571, 16
      %v877 = vpop.permute.xlu0 %876
      %878 = vrot.lane.b32.xlu0 %v573, 16
      %v879 = vpop.permute.xlu0 %878
      %880 = vrot.lane.b32.xlu0 %v575, 16
      %v881 = vpop.permute.xlu0 %880
      %882 = vrot.lane.b32.xlu0 %v574, 16
      %v883 = vpop.permute.xlu0 %882
      %884 = vrot.lane.b32.xlu0 %v576, 16
      %v885 = vpop.permute.xlu0 %884
      %886 = vrot.lane.b32.xlu0 %v578, 16
      %v887 = vpop.permute.xlu0 %886
      %888 = vrot.lane.b32.xlu0 %v577, 16
      %v889 = vpop.permute.xlu0 %888
      %890 = vrot.lane.b32.xlu0 %v579, 16
      %v891 = vpop.permute.xlu0 %890
      %892 = vrot.lane.b32.xlu0 %v581, 16
      %v893 = vpop.permute.xlu0 %892
      %894 = vrot.lane.b32.xlu0 %v580, 16
      %v895 = vpop.permute.xlu0 %894
      %896 = vrot.lane.b32.xlu0 %v582, 16
      %v897 = vpop.permute.xlu0 %896
      %898 = vrot.lane.b32.xlu0 %v584, 16
      %v899 = vpop.permute.xlu0 %898
      %900 = vrot.lane.b32.xlu0 %v583, 16
      %v901 = vpop.permute.xlu0 %900
      %902 = vrot.lane.b32.xlu0 %v585, 16
      %v903 = vpop.permute.xlu0 %902
      %904 = vrot.lane.b32.xlu0 %v587, 16
      %v905 = vpop.permute.xlu0 %904
      %906 = vrot.lane.b32.xlu0 %v586, 16
      %v907 = vpop.permute.xlu0 %906
      %908 = vrot.lane.b32.xlu0 %v863, 16
      %v909 = vpop.permute.xlu0 %908
      %910 = vrot.lane.b32.xlu0 %v865, 16
      %v911 = vpop.permute.xlu0 %910
      %912 = vrot.lane.b32.xlu0 %v864, 16
      %v913 = vpop.permute.xlu0 %912
      %v939 = vrot.slane %v540, 2
      %v940 = vrot.slane %v541, 2
      %v941 = vsel %vm668, %v939, %v940
      %v942 = vrot.slane %v542, 2
      %v943 = vsel %vm668, %v940, %v942
      %944 = vrot.lane.b32.xlu0 %v674, 20
      %v945 = vpop.permute.xlu0 %944
      %946 = vrot.lane.b32.xlu0 %v676, 20
      %v947 = vpop.permute.xlu0 %946
      %948 = vrot.lane.b32.xlu0 %v678, 20
      %v949 = vpop.permute.xlu0 %948
      %950 = vrot.lane.b32.xlu0 %v679, 20
      %v951 = vpop.permute.xlu0 %950
      %952 = vrot.lane.b32.xlu0 %v681, 20
      %v953 = vpop.permute.xlu0 %952
      %954 = vrot.lane.b32.xlu0 %v683, 20
      %v955 = vpop.permute.xlu0 %954
      %956 = vrot.lane.b32.xlu0 %v684, 20
      %v957 = vpop.permute.xlu0 %956
      %958 = vrot.lane.b32.xlu0 %v686, 20
      %v959 = vpop.permute.xlu0 %958
      %960 = vrot.lane.b32.xlu0 %v688, 20
      %v961 = vpop.permute.xlu0 %960
      %962 = vrot.lane.b32.xlu0 %v689, 20
      %v963 = vpop.permute.xlu0 %962
      %964 = vrot.lane.b32.xlu0 %v691, 20
      %v965 = vpop.permute.xlu0 %964
      %966 = vrot.lane.b32.xlu0 %v693, 20
      %v967 = vpop.permute.xlu0 %966
      %968 = vrot.lane.b32.xlu0 %v694, 20
      %v969 = vpop.permute.xlu0 %968
      %970 = vrot.lane.b32.xlu0 %v696, 20
      %v971 = vpop.permute.xlu0 %970
      %972 = vrot.lane.b32.xlu0 %v698, 20
      %v973 = vpop.permute.xlu0 %972
      %974 = vrot.lane.b32.xlu0 %v699, 20
      %v975 = vpop.permute.xlu0 %974
      %976 = vrot.lane.b32.xlu0 %v701, 20
      %v977 = vpop.permute.xlu0 %976
      %978 = vrot.lane.b32.xlu0 %v703, 20
      %v979 = vpop.permute.xlu0 %978
      %980 = vrot.lane.b32.xlu0 %v704, 20
      %v981 = vpop.permute.xlu0 %980
      %982 = vrot.lane.b32.xlu0 %v706, 20
      %v983 = vpop.permute.xlu0 %982
      %984 = vrot.lane.b32.xlu0 %v708, 20
      %v985 = vpop.permute.xlu0 %984
      %986 = vrot.lane.b32.xlu0 %v939, 20
      %v987 = vpop.permute.xlu0 %986
      %988 = vrot.lane.b32.xlu0 %v941, 20
      %v989 = vpop.permute.xlu0 %988
      %990 = vrot.lane.b32.xlu0 %v943, 20
      %v991 = vpop.permute.xlu0 %990
      %1019 = vrot.lane.b32.xlu0 %v515, 24
      %v1020 = vpop.permute.xlu0 %1019
      %1021 = vrot.lane.b32.xlu0 %v516, 24
      %v1022 = vpop.permute.xlu0 %1021
      %1023 = vrot.lane.b32.xlu0 %v517, 24
      %v1024 = vpop.permute.xlu0 %1023
      %1025 = vrot.lane.b32.xlu0 %v519, 24
      %v1026 = vpop.permute.xlu0 %1025
      %1027 = vrot.lane.b32.xlu0 %v520, 24
      %v1028 = vpop.permute.xlu0 %1027
      %1029 = vrot.lane.b32.xlu0 %v521, 24
      %v1030 = vpop.permute.xlu0 %1029
      %1031 = vrot.lane.b32.xlu0 %v523, 24
      %v1032 = vpop.permute.xlu0 %1031
      %1033 = vrot.lane.b32.xlu0 %v524, 24
      %v1034 = vpop.permute.xlu0 %1033
      %1035 = vrot.lane.b32.xlu0 %v525, 24
      %v1036 = vpop.permute.xlu0 %1035
      %1037 = vrot.lane.b32.xlu0 %v527, 24
      %v1038 = vpop.permute.xlu0 %1037
      %1039 = vrot.lane.b32.xlu0 %v528, 24
      %v1040 = vpop.permute.xlu0 %1039
      %1041 = vrot.lane.b32.xlu0 %v529, 24
      %v1042 = vpop.permute.xlu0 %1041
      %1043 = vrot.lane.b32.xlu0 %v531, 24
      %v1044 = vpop.permute.xlu0 %1043
      %1045 = vrot.lane.b32.xlu0 %v532, 24
      %v1046 = vpop.permute.xlu0 %1045
      %1047 = vrot.lane.b32.xlu0 %v533, 24
      %v1048 = vpop.permute.xlu0 %1047
      %1049 = vrot.lane.b32.xlu0 %v535, 24
      %v1050 = vpop.permute.xlu0 %1049
      %1051 = vrot.lane.b32.xlu0 %v536, 24
      %v1052 = vpop.permute.xlu0 %1051
      %1053 = vrot.lane.b32.xlu0 %v537, 24
      %v1054 = vpop.permute.xlu0 %1053
      %1055 = vrot.lane.b32.xlu0 %v539, 24
      %v1056 = vpop.permute.xlu0 %1055
      %1057 = vrot.lane.b32.xlu0 %v540, 24
      %v1058 = vpop.permute.xlu0 %1057
      %1059 = vrot.lane.b32.xlu0 %v541, 24
      %v1060 = vpop.permute.xlu0 %1059
      %1061 = vrot.lane.b32.xlu0 %v543, 24
      %v1062 = vpop.permute.xlu0 %1061
      %1063 = vrot.lane.b32.xlu0 %v544, 24
      %v1064 = vpop.permute.xlu0 %1063
      %1065 = vrot.lane.b32.xlu0 %v545, 24
      %v1066 = vpop.permute.xlu0 %1065
      %v1091 = vrot.slane %v544, 1
      %v1092 = vrot.slane %v545, 1
      %v1093 = vsel %vm563, %v1091, %v1092
      %1094 = vrot.lane.b32.xlu0 %v570, 28
      %v1095 = vpop.permute.xlu0 %1094
      %1096 = vrot.lane.b32.xlu0 %v572, 28
      %v1097 = vpop.permute.xlu0 %1096
      %1098 = vrot.lane.b32.xlu0 %v571, 28
      %v1099 = vpop.permute.xlu0 %1098
      %1100 = vrot.lane.b32.xlu0 %v573, 28
      %v1101 = vpop.permute.xlu0 %1100
      %1102 = vrot.lane.b32.xlu0 %v575, 28
      %v1103 = vpop.permute.xlu0 %1102
      %1104 = vrot.lane.b32.xlu0 %v574, 28
      %v1105 = vpop.permute.xlu0 %1104
      %1106 = vrot.lane.b32.xlu0 %v576, 28
      %v1107 = vpop.permute.xlu0 %1106
      %1108 = vrot.lane.b32.xlu0 %v578, 28
      %v1109 = vpop.permute.xlu0 %1108
      %1110 = vrot.lane.b32.xlu0 %v577, 28
      %v1111 = vpop.permute.xlu0 %1110
      %1112 = vrot.lane.b32.xlu0 %v579, 28
      %v1113 = vpop.permute.xlu0 %1112
      %1114 = vrot.lane.b32.xlu0 %v581, 28
      %v1115 = vpop.permute.xlu0 %1114
      %1116 = vrot.lane.b32.xlu0 %v580, 28
      %v1117 = vpop.permute.xlu0 %1116
      %1118 = vrot.lane.b32.xlu0 %v582, 28
      %v1119 = vpop.permute.xlu0 %1118
      %1120 = vrot.lane.b32.xlu0 %v584, 28
      %v1121 = vpop.permute.xlu0 %1120
      %1122 = vrot.lane.b32.xlu0 %v583, 28
      %v1123 = vpop.permute.xlu0 %1122
      %1124 = vrot.lane.b32.xlu0 %v585, 28
      %v1125 = vpop.permute.xlu0 %1124
      %1126 = vrot.lane.b32.xlu0 %v587, 28
      %v1127 = vpop.permute.xlu0 %1126
      %1128 = vrot.lane.b32.xlu0 %v586, 28
      %v1129 = vpop.permute.xlu0 %1128
      %1130 = vrot.lane.b32.xlu0 %v863, 28
      %v1131 = vpop.permute.xlu0 %1130
      %1132 = vrot.lane.b32.xlu0 %v865, 28
      %v1133 = vpop.permute.xlu0 %1132
      %1134 = vrot.lane.b32.xlu0 %v864, 28
      %v1135 = vpop.permute.xlu0 %1134
      %1136 = vrot.lane.b32.xlu0 %v1091, 28
      %v1137 = vpop.permute.xlu0 %1136
      %1138 = vrot.lane.b32.xlu0 %v1093, 28
      %v1139 = vpop.permute.xlu0 %1138
      %1140 = vrot.lane.b32.xlu0 %v1092, 28
      %v1141 = vpop.permute.xlu0 %1140
      %v1167 = vrot.slane %v544, 2
      %v1168 = vrot.slane %v545, 2
      %v1169 = vsel %vm668, %v1167, %v1168
      %v1170 = vrot.slane %v546, 2
      %v1171 = vsel %vm668, %v1168, %v1170
      %1172 = vrot.lane.b32.xlu0 %v679, 32
      %v1173 = vpop.permute.xlu0 %1172
      %1174 = vrot.lane.b32.xlu0 %v681, 32
      %v1175 = vpop.permute.xlu0 %1174
      %1176 = vrot.lane.b32.xlu0 %v683, 32
      %v1177 = vpop.permute.xlu0 %1176
      %1178 = vrot.lane.b32.xlu0 %v684, 32
      %v1179 = vpop.permute.xlu0 %1178
      %1180 = vrot.lane.b32.xlu0 %v686, 32
      %v1181 = vpop.permute.xlu0 %1180
      %1182 = vrot.lane.b32.xlu0 %v688, 32
      %v1183 = vpop.permute.xlu0 %1182
      %1184 = vrot.lane.b32.xlu0 %v689, 32
      %v1185 = vpop.permute.xlu0 %1184
      %1186 = vrot.lane.b32.xlu0 %v691, 32
      %v1187 = vpop.permute.xlu0 %1186
      %1188 = vrot.lane.b32.xlu0 %v693, 32
      %v1189 = vpop.permute.xlu0 %1188
      %1190 = vrot.lane.b32.xlu0 %v694, 32
      %v1191 = vpop.permute.xlu0 %1190
      %1192 = vrot.lane.b32.xlu0 %v696, 32
      %v1193 = vpop.permute.xlu0 %1192
      %1194 = vrot.lane.b32.xlu0 %v698, 32
      %v1195 = vpop.permute.xlu0 %1194
      %1196 = vrot.lane.b32.xlu0 %v699, 32
      %v1197 = vpop.permute.xlu0 %1196
      %1198 = vrot.lane.b32.xlu0 %v701, 32
      %v1199 = vpop.permute.xlu0 %1198
      %1200 = vrot.lane.b32.xlu0 %v703, 32
      %v1201 = vpop.permute.xlu0 %1200
      %1202 = vrot.lane.b32.xlu0 %v704, 32
      %v1203 = vpop.permute.xlu0 %1202
      %1204 = vrot.lane.b32.xlu0 %v706, 32
      %v1205 = vpop.permute.xlu0 %1204
      %1206 = vrot.lane.b32.xlu0 %v708, 32
      %v1207 = vpop.permute.xlu0 %1206
      %1208 = vrot.lane.b32.xlu0 %v939, 32
      %v1209 = vpop.permute.xlu0 %1208
      %1210 = vrot.lane.b32.xlu0 %v941, 32
      %v1211 = vpop.permute.xlu0 %1210
      %1212 = vrot.lane.b32.xlu0 %v943, 32
      %v1213 = vpop.permute.xlu0 %1212
      %1214 = vrot.lane.b32.xlu0 %v1167, 32
      %v1215 = vpop.permute.xlu0 %1214
      %1216 = vrot.lane.b32.xlu0 %v1169, 32
      %v1217 = vpop.permute.xlu0 %1216
      %1218 = vrot.lane.b32.xlu0 %v1171, 32
      %v1219 = vpop.permute.xlu0 %1218
      %vm1244 = vcmask 31744
      %v1245 = vsel %vm1244, %v507, %v589
      %v1246 = vsel %vm1244, %v508, %v591
      %v1247 = vsel %vm1244, %v509, %v593
      %v1248 = vsel %vm1244, %v511, %v595
      %v1249 = vsel %vm1244, %v512, %v597
      %v1250 = vsel %vm1244, %v513, %v599
      %v1251 = vsel %vm1244, %v515, %v601
      %v1252 = vsel %vm1244, %v516, %v603
      %v1253 = vsel %vm1244, %v517, %v605
      %v1254 = vsel %vm1244, %v519, %v607
      %v1255 = vsel %vm1244, %v520, %v609
      %v1256 = vsel %vm1244, %v521, %v611
      %v1257 = vsel %vm1244, %v523, %v613
      %v1258 = vsel %vm1244, %v524, %v615
      %v1259 = vsel %vm1244, %v525, %v617
      %v1260 = vsel %vm1244, %v527, %v619
      %v1261 = vsel %vm1244, %v528, %v621
      %v1262 = vsel %vm1244, %v529, %v623
      %v1263 = vsel %vm1244, %v531, %v625
      %v1264 = vsel %vm1244, %v532, %v627
      %v1265 = vsel %vm1244, %v533, %v629
      %v1266 = vsel %vm1244, %v535, %v631
      %v1267 = vsel %vm1244, %v536, %v633
      %v1268 = vsel %vm1244, %v537, %v635
      %vm1269 = vcmask 64512
      %v1270 = vsel %vm1269, %v1245, %v710
      %v1271 = vsel %vm1269, %v1246, %v712
      %v1272 = vsel %vm1269, %v1247, %v714
      %v1273 = vsel %vm1269, %v1248, %v716
      %v1274 = vsel %vm1269, %v1249, %v718
      %v1275 = vsel %vm1269, %v1250, %v720
      %v1276 = vsel %vm1269, %v1251, %v722
      %v1277 = vsel %vm1269, %v1252, %v724
      %v1278 = vsel %vm1269, %v1253, %v726
      %v1279 = vsel %vm1269, %v1254, %v728
      %v1280 = vsel %vm1269, %v1255, %v730
      %v1281 = vsel %vm1269, %v1256, %v732
      %v1282 = vsel %vm1269, %v1257, %v734
      %v1283 = vsel %vm1269, %v1258, %v736
      %v1284 = vsel %vm1269, %v1259, %v738
      %v1285 = vsel %vm1269, %v1260, %v740
      %v1286 = vsel %vm1269, %v1261, %v742
      %v1287 = vsel %vm1269, %v1262, %v744
      %v1288 = vsel %vm1269, %v1263, %v746
      %v1289 = vsel %vm1269, %v1264, %v748
      %v1290 = vsel %vm1269, %v1265, %v750
      %v1291 = vsel %vm1269, %v1266, %v752
      %v1292 = vsel %vm1269, %v1267, %v754
      %v1293 = vsel %vm1269, %v1268, %v756
      %vm1294 = vcmask 97280
      %v1295 = vsel %vm1294, %v1270, %v792
      %v1296 = vsel %vm1294, %v1271, %v794
      %v1297 = vsel %vm1294, %v1272, %v796
      %v1298 = vsel %vm1294, %v1273, %v798
      %v1299 = vsel %vm1294, %v1274, %v800
      %v1300 = vsel %vm1294, %v1275, %v802
      %v1301 = vsel %vm1294, %v1276, %v804
      %v1302 = vsel %vm1294, %v1277, %v806
      %v1303 = vsel %vm1294, %v1278, %v808
      %v1304 = vsel %vm1294, %v1279, %v810
      %v1305 = vsel %vm1294, %v1280, %v812
      %v1306 = vsel %vm1294, %v1281, %v814
      %v1307 = vsel %vm1294, %v1282, %v816
      %v1308 = vsel %vm1294, %v1283, %v818
      %v1309 = vsel %vm1294, %v1284, %v820
      %v1310 = vsel %vm1294, %v1285, %v822
      %v1311 = vsel %vm1294, %v1286, %v824
      %v1312 = vsel %vm1294, %v1287, %v826
      %v1313 = vsel %vm1294, %v1288, %v828
      %v1314 = vsel %vm1294, %v1289, %v830
      %v1315 = vsel %vm1294, %v1290, %v832
      %v1316 = vsel %vm1294, %v1291, %v834
      %v1317 = vsel %vm1294, %v1292, %v836
      %v1318 = vsel %vm1294, %v1293, %v838
      %vm1319 = vcmask 130048
      %v1320 = vsel %vm1319, %v1295, %v867
      %v1321 = vsel %vm1319, %v1296, %v869
      %v1322 = vsel %vm1319, %v1297, %v871
      %v1323 = vsel %vm1319, %v1298, %v873
      %v1324 = vsel %vm1319, %v1299, %v875
      %v1325 = vsel %vm1319, %v1300, %v877
      %v1326 = vsel %vm1319, %v1301, %v879
      %v1327 = vsel %vm1319, %v1302, %v881
      %v1328 = vsel %vm1319, %v1303, %v883
      %v1329 = vsel %vm1319, %v1304, %v885
      %v1330 = vsel %vm1319, %v1305, %v887
      %v1331 = vsel %vm1319, %v1306, %v889
      %v1332 = vsel %vm1319, %v1307, %v891
      %v1333 = vsel %vm1319, %v1308, %v893
      %v1334 = vsel %vm1319, %v1309, %v895
      %v1335 = vsel %vm1319, %v1310, %v897
      %v1336 = vsel %vm1319, %v1311, %v899
      %v1337 = vsel %vm1319, %v1312, %v901
      %v1338 = vsel %vm1319, %v1313, %v903
      %v1339 = vsel %vm1319, %v1314, %v905
      %v1340 = vsel %vm1319, %v1315, %v907
      %v1341 = vsel %vm1319, %v1316, %v909
      %v1342 = vsel %vm1319, %v1317, %v911
      %v1343 = vsel %vm1319, %v1318, %v913
      %vm1344 = vcmask 162816
      %v1345 = vsel %vm1344, %v1320, %v945
      %v1346 = vsel %vm1344, %v1321, %v947
      %v1347 = vsel %vm1344, %v1322, %v949
      %v1348 = vsel %vm1344, %v1323, %v951
      %v1349 = vsel %vm1344, %v1324, %v953
      %v1350 = vsel %vm1344, %v1325, %v955
      %v1351 = vsel %vm1344, %v1326, %v957
      %v1352 = vsel %vm1344, %v1327, %v959
      %v1353 = vsel %vm1344, %v1328, %v961
      %v1354 = vsel %vm1344, %v1329, %v963
      %v1355 = vsel %vm1344, %v1330, %v965
      %v1356 = vsel %vm1344, %v1331, %v967
      %v1357 = vsel %vm1344, %v1332, %v969
      %v1358 = vsel %vm1344, %v1333, %v971
      %v1359 = vsel %vm1344, %v1334, %v973
      %v1360 = vsel %vm1344, %v1335, %v975
      %v1361 = vsel %vm1344, %v1336, %v977
      %v1362 = vsel %vm1344, %v1337, %v979
      %v1363 = vsel %vm1344, %v1338, %v981
      %v1364 = vsel %vm1344, %v1339, %v983
      %v1365 = vsel %vm1344, %v1340, %v985
      %v1366 = vsel %vm1344, %v1341, %v987
      %v1367 = vsel %vm1344, %v1342, %v989
      %v1368 = vsel %vm1344, %v1343, %v991
      %vm1369 = vcmask 195584
      %v1370 = vsel %vm1369, %v1345, %v1020
      %v1371 = vsel %vm1369, %v1346, %v1022
      %v1372 = vsel %vm1369, %v1347, %v1024
      %v1373 = vsel %vm1369, %v1348, %v1026
      %v1374 = vsel %vm1369, %v1349, %v1028
      %v1375 = vsel %vm1369, %v1350, %v1030
      %v1376 = vsel %vm1369, %v1351, %v1032
      %v1377 = vsel %vm1369, %v1352, %v1034
      %v1378 = vsel %vm1369, %v1353, %v1036
      %v1379 = vsel %vm1369, %v1354, %v1038
      %v1380 = vsel %vm1369, %v1355, %v1040
      %v1381 = vsel %vm1369, %v1356, %v1042
      %v1382 = vsel %vm1369, %v1357, %v1044
      %v1383 = vsel %vm1369, %v1358, %v1046
      %v1384 = vsel %vm1369, %v1359, %v1048
      %v1385 = vsel %vm1369, %v1360, %v1050
      %v1386 = vsel %vm1369, %v1361, %v1052
      %v1387 = vsel %vm1369, %v1362, %v1054
      %v1388 = vsel %vm1369, %v1363, %v1056
      %v1389 = vsel %vm1369, %v1364, %v1058
      %v1390 = vsel %vm1369, %v1365, %v1060
      %v1391 = vsel %vm1369, %v1366, %v1062
      %v1392 = vsel %vm1369, %v1367, %v1064
      %v1393 = vsel %vm1369, %v1368, %v1066
      %vm1394 = vcmask 228352
      %v1395 = vsel %vm1394, %v1370, %v1095
      %v1396 = vsel %vm1394, %v1371, %v1097
      %v1397 = vsel %vm1394, %v1372, %v1099
      %v1398 = vsel %vm1394, %v1373, %v1101
      %v1399 = vsel %vm1394, %v1374, %v1103
      %v1400 = vsel %vm1394, %v1375, %v1105
      %v1401 = vsel %vm1394, %v1376, %v1107
      %v1402 = vsel %vm1394, %v1377, %v1109
      %v1403 = vsel %vm1394, %v1378, %v1111
      %v1404 = vsel %vm1394, %v1379, %v1113
      %v1405 = vsel %vm1394, %v1380, %v1115
      %v1406 = vsel %vm1394, %v1381, %v1117
      %v1407 = vsel %vm1394, %v1382, %v1119
      %v1408 = vsel %vm1394, %v1383, %v1121
      %v1409 = vsel %vm1394, %v1384, %v1123
      %v1410 = vsel %vm1394, %v1385, %v1125
      %v1411 = vsel %vm1394, %v1386, %v1127
      %v1412 = vsel %vm1394, %v1387, %v1129
      %v1413 = vsel %vm1394, %v1388, %v1131
      %v1414 = vsel %vm1394, %v1389, %v1133
      %v1415 = vsel %vm1394, %v1390, %v1135
      %v1416 = vsel %vm1394, %v1391, %v1137
      %v1417 = vsel %vm1394, %v1392, %v1139
      %v1418 = vsel %vm1394, %v1393, %v1141
      %vm1419 = vcmask 261120
      %v1420 = vsel %vm1419, %v1395, %v1173
      %v1421 = vsel %vm1419, %v1396, %v1175
      %v1422 = vsel %vm1419, %v1397, %v1177
      %v1423 = vsel %vm1419, %v1398, %v1179
      %v1424 = vsel %vm1419, %v1399, %v1181
      %v1425 = vsel %vm1419, %v1400, %v1183
      %v1426 = vsel %vm1419, %v1401, %v1185
      %v1427 = vsel %vm1419, %v1402, %v1187
      %v1428 = vsel %vm1419, %v1403, %v1189
      %v1429 = vsel %vm1419, %v1404, %v1191
      %v1430 = vsel %vm1419, %v1405, %v1193
      %v1431 = vsel %vm1419, %v1406, %v1195
      %v1432 = vsel %vm1419, %v1407, %v1197
      %v1433 = vsel %vm1419, %v1408, %v1199
      %v1434 = vsel %vm1419, %v1409, %v1201
      %v1435 = vsel %vm1419, %v1410, %v1203
      %v1436 = vsel %vm1419, %v1411, %v1205
      %v1437 = vsel %vm1419, %v1412, %v1207
      %v1438 = vsel %vm1419, %v1413, %v1209
      %v1439 = vsel %vm1419, %v1414, %v1211
      %v1440 = vsel %vm1419, %v1415, %v1213
      %v1441 = vsel %vm1419, %v1416, %v1215
      %v1442 = vsel %vm1419, %v1417, %v1217
      %v1443 = vsel %vm1419, %v1418, %v1219
      %vm1468 = vcmask 1040384
      %v1469 = vrot.slane %v1420, 7
      %v1470 = vrot.slane %v1421, 7
      %v1471 = vsel %vm1468, %v1469, %v1470
      %v1472 = vrot.slane %v1422, 7
      %v1473 = vsel %vm1468, %v1470, %v1472
      %v1474 = vrot.slane %v1423, 7
      %v1475 = vrot.slane %v1424, 7
      %v1476 = vsel %vm1468, %v1474, %v1475
      %v1477 = vrot.slane %v1425, 7
      %v1478 = vsel %vm1468, %v1475, %v1477
      %v1479 = vrot.slane %v1426, 7
      %v1480 = vrot.slane %v1427, 7
      %v1481 = vsel %vm1468, %v1479, %v1480
      %v1482 = vrot.slane %v1428, 7
      %v1483 = vsel %vm1468, %v1480, %v1482
      %v1484 = vrot.slane %v1429, 7
      %v1485 = vrot.slane %v1430, 7
      %v1486 = vsel %vm1468, %v1484, %v1485
      %v1487 = vrot.slane %v1431, 7
      %v1488 = vsel %vm1468, %v1485, %v1487
      %v1489 = vrot.slane %v1432, 7
      %v1490 = vrot.slane %v1433, 7
      %v1491 = vsel %vm1468, %v1489, %v1490
      %v1492 = vrot.slane %v1434, 7
      %v1493 = vsel %vm1468, %v1490, %v1492
      %v1494 = vrot.slane %v1435, 7
      %v1495 = vrot.slane %v1436, 7
      %v1496 = vsel %vm1468, %v1494, %v1495
      %v1497 = vrot.slane %v1437, 7
      %v1498 = vsel %vm1468, %v1495, %v1497
      %v1499 = vrot.slane %v1438, 7
      %v1500 = vrot.slane %v1439, 7
      %v1501 = vsel %vm1468, %v1499, %v1500
      %v1502 = vrot.slane %v1440, 7
      %v1503 = vsel %vm1468, %v1500, %v1502
      %v1504 = vrot.slane %v1441, 7
      %v1505 = vrot.slane %v1442, 7
      %v1506 = vsel %vm1468, %v1504, %v1505
      %v1507 = vrot.slane %v1443, 7
      %v1508 = vsel %vm1468, %v1505, %v1507
      %v1525 = vpack.c.bf16 %v1473, %v1471
      %v1526 = vpack.c.bf16 %v1478, %v1476
      %v1527 = vpack.c.bf16 %v1483, %v1481
      %v1528 = vpack.c.bf16 %v1488, %v1486
      %v1529 = vpack.c.bf16 %v1493, %v1491
      %v1530 = vpack.c.bf16 %v1498, %v1496
      %v1531 = vpack.c.bf16 %v1503, %v1501
      %v1532 = vpack.c.bf16 %v1508, %v1506
      %v1533 = vld [vmem:[%s3] sm:$0xf]
      %v1534 = vld [vmem:[%s3 + $0x4] sm:$0xf]
      %v1535 = vld [vmem:[%s3 + $0x8] sm:$0xf]
      %v1536 = vld [vmem:[%s3 + $0xc] sm:$0xf]
      %v1537 = vld [vmem:[%s3 + $0x10] sm:$0x3]
      %v1538 = vld [vmem:[%s4] sm:$0x1]
      %v1540 = vlaneseq
      %v1541 = vshrl.u32 %v1540, 7
      %v1542 = vsub.s32 0, %v1541
      %v1543 = vrot.slane %v1538, %v1542
      %v1550 = vunpack.c.l.b16 %v1533
      %v1551 = vunpack.c.l.b16 %v1534
      %v1552 = vunpack.c.l.b16 %v1535
      %v1553 = vunpack.c.l.b16 %v1536
      %v1554 = vunpack.c.l.b16 %v1537
      %v1555 = vpack.c.b16 %v1551, %v1550
      %v1556 = vpack.c.b16 %v1553, %v1552
      %v1557 = vpack.c.b16 %v1554, %v1554
      %vm1560 = vcmask 293888
      %v1562 = vsel %vm1560, %v1525, 0
      %v1565 = vsel %vm1560, %v1526, 0
      %v1568 = vsel %vm1560, %v1527, 0
      %v1571 = vsel %vm1560, %v1528, 0
      %v1574 = vsel %vm1560, %v1529, 0
      %v1577 = vsel %vm1560, %v1530, 0
      %v1580 = vsel %vm1560, %v1531, 0
      %v1583 = vsel %vm1560, %v1532, 0
      %vm1585 = vcmask 1041408
      %v1587 = vsel %vm1585, %v1557, 0
      %1589 = vmatprep.subr.bf16.mxu0 0
      %1590 = vmatpush1.bf16.msra.mxu0 0
      %1591 = vmatprep.subr.bf16.mxu0 0
      %1592 = vmatpush1.bf16.msra.mxu0 0
      %1593 = vmatprep.subr.bf16.mxu0 0
      %1594 = vmatpush1.bf16.msra.mxu0 0
      %1595 = vmatprep.subr.bf16.mxu0 0
      %1596 = vmatpush1.bf16.msra.mxu0 0
      %1597 = vmatprep.subr.bf16.mxu0 0
      %1598 = vmatpush1.bf16.msra.mxu0 0
      %1599 = vmatprep.subr.bf16.mxu0 0
      %1600 = vmatpush1.bf16.msra.mxu0 %v1587
      %1601 = vmatprep.subr.bf16.mxu0 0
      %1602 = vmatpush1.bf16.msra.mxu0 %v1556
      %1603 = vmatprep.subr.bf16.mxu0 0
      %1604 = vmatpush1.bf16.msra.mxu0 %v1555
      %1605 = vmatprep.subr.bf16.mxu0 0
      %1606 = vmatpush2.bf16.msra.mxu0 0
      %1607 = vmatprep.subr.bf16.mxu0 0
      %1608 = vmatpush2.bf16.msra.mxu0 0
      %1609 = vmatprep.subr.bf16.mxu0 0
      %1610 = vmatpush2.bf16.msra.mxu0 0
      %1611 = vmatprep.subr.bf16.mxu0 0
      %1612 = vmatpush2.bf16.msra.mxu0 0
      %1613 = vmatprep.subr.bf16.mxu0 0
      %1614 = vmatpush2.bf16.msra.mxu0 0
      %1615 = vmatprep.subr.bf16.mxu0 0
      %1616 = vmatpush2.bf16.msra.mxu0 0
      %1617 = vmatprep.subr.bf16.mxu0 0
      %1618 = vmatpush2.bf16.msra.mxu0 0
      %1619 = vmatprep.subr.bf16.mxu0 0
      %1620 = vmatpush2.bf16.msra.mxu0 0
      %1621 = vmatprep.mubr.bf16.mxu0 0
      %1622 = vmatmul.mubr.bf16.gmra.mxu0 %v1562
      %v1623 = vpop.f32.mrf.mxu0
      %v1624 = vadd.f32 %v1543, %v1623
      %v1625 = vpop.f32.mrf.mxu0
      %v1626 = vpop.f32.mrf.mxu0
      %v1627 = vadd.f32 %v1543, %v1626
      %v1628 = vpop.f32.mrf.mxu0
      %1629 = vmatprep.mubr.bf16.mxu0 0
      %1630 = vmatmul.mubr.bf16.gmra.mxu0 %v1565
      %v1631 = vpop.f32.mrf.mxu0
      %v1632 = vadd.f32 %v1543, %v1631
      %v1633 = vpop.f32.mrf.mxu0
      %v1634 = vpop.f32.mrf.mxu0
      %v1635 = vadd.f32 %v1543, %v1634
      %v1636 = vpop.f32.mrf.mxu0
      %1637 = vmatprep.mubr.bf16.mxu0 0
      %1638 = vmatmul.mubr.bf16.gmra.mxu0 %v1568
      %v1639 = vpop.f32.mrf.mxu0
      %v1640 = vadd.f32 %v1543, %v1639
      %v1641 = vpop.f32.mrf.mxu0
      %v1642 = vpop.f32.mrf.mxu0
      %v1643 = vadd.f32 %v1543, %v1642
      %v1644 = vpop.f32.mrf.mxu0
      %1645 = vmatprep.mubr.bf16.mxu0 0
      %1646 = vmatmul.mubr.bf16.gmra.mxu0 %v1571
      %v1647 = vpop.f32.mrf.mxu0
      %v1648 = vadd.f32 %v1543, %v1647
      %v1649 = vpop.f32.mrf.mxu0
      %v1650 = vpop.f32.mrf.mxu0
      %v1651 = vadd.f32 %v1543, %v1650
      %v1652 = vpop.f32.mrf.mxu0
      %1653 = vmatprep.mubr.bf16.mxu0 0
      %1654 = vmatmul.mubr.bf16.gmra.mxu0 %v1574
      %v1655 = vpop.f32.mrf.mxu0
      %v1656 = vadd.f32 %v1543, %v1655
      %v1657 = vpop.f32.mrf.mxu0
      %v1658 = vpop.f32.mrf.mxu0
      %v1659 = vadd.f32 %v1543, %v1658
      %v1660 = vpop.f32.mrf.mxu0
      %1661 = vmatprep.mubr.bf16.mxu0 0
      %1662 = vmatmul.mubr.bf16.gmra.mxu0 %v1577
      %v1663 = vpop.f32.mrf.mxu0
      %v1664 = vadd.f32 %v1543, %v1663
      %v1665 = vpop.f32.mrf.mxu0
      %v1666 = vpop.f32.mrf.mxu0
      %v1667 = vadd.f32 %v1543, %v1666
      %v1668 = vpop.f32.mrf.mxu0
      %1669 = vmatprep.mubr.bf16.mxu0 0
      %1670 = vmatmul.mubr.bf16.gmra.mxu0 %v1580
      %v1671 = vpop.f32.mrf.mxu0
      %v1672 = vadd.f32 %v1543, %v1671
      %v1673 = vpop.f32.mrf.mxu0
      %v1674 = vpop.f32.mrf.mxu0
      %v1675 = vadd.f32 %v1543, %v1674
      %v1676 = vpop.f32.mrf.mxu0
      %1677 = vmatprep.mubr.bf16.mxu0 0
      %1678 = vmatmul.mubr.bf16.gmra.mxu0 %v1583
      %v1679 = vpop.f32.mrf.mxu0
      %v1680 = vadd.f32 %v1543, %v1679
      %v1681 = vpop.f32.mrf.mxu0
      %v1682 = vpop.f32.mrf.mxu0
      %v1683 = vadd.f32 %v1543, %v1682
      %v1684 = vpop.f32.mrf.mxu0
      %1685 = vdwg.mxu0
      %1686 = vst [vmem:[%s248] sm:$0xff] %v1624
      %1687 = vst [vmem:[%s248 + $0x8] sm:$0xff] %v1627
      %1688 = vst [vmem:[%s248 + $0x10] sm:$0xff] %v1632
      %1689 = vst [vmem:[%s248 + $0x18] sm:$0xff] %v1635
      %1690 = vst [vmem:[%s248 + $0x20] sm:$0xff] %v1640
      %1691 = vst [vmem:[%s248 + $0x28] sm:$0xff] %v1643
      %1692 = vst [vmem:[%s248 + $0x30] sm:$0xff] %v1648
      %1693 = vst [vmem:[%s248 + $0x38] sm:$0xff] %v1651
      %1694 = vst [vmem:[%s248 + $0x40] sm:$0xff] %v1656
      %1695 = vst [vmem:[%s248 + $0x48] sm:$0xff] %v1659
      %1696 = vst [vmem:[%s248 + $0x50] sm:$0xff] %v1664
      %1697 = vst [vmem:[%s248 + $0x58] sm:$0xff] %v1667
      %1698 = vst [vmem:[%s248 + $0x60] sm:$0xff] %v1672
      %1699 = vst [vmem:[%s248 + $0x68] sm:$0xff] %v1675
      %1700 = vst [vmem:[%s248 + $0x70] sm:$0xff] %v1680
      %1701 = vst [vmem:[%s248 + $0x78] sm:$0xff] %v1683
      %s1702 = smul.u32 8, %s21
      %p1703 = scmp.lt.s32.totalorder %s20, 1
      %s1704 = scalar_select %p1703, %s20, 1
      %p1705 = scmp.lt.s32.totalorder %s1702, 15
      %s1706 = scalar_select %p1705, %s1702, 15
      %s1707 = smul.addr %s1706, 2
      %s1708 = smul.addr %s1704, 32
      %s1709 = sadd.s32 %s1707, %s1708
      %s1710 = smul.addr %s1709, 8
      %s1711 = scalar_lea.vmem %s5, %s1710
      // Predicated region
      $region45: #{conv2d_module_forward.3} parent=39 // pred_check
        %p1712 = pneg %p158
      $region46: #{conv2d_module_forward.3} parent=39 // pred_check_branch
        %1714 = sbr.rel (%p1712) target = $region48
      $region47: #{conv2d_module_forward.3} parent=39 // pred_region
        %s1715 = smul.u32 8, %s21
      $region48: #{conv2d_module_forward.3} parent=39 // pred_fallthru
        _
    $region40: #{conv2d_module_forward.3} parent=5 // pred_fallthru
      _
    %p1716 = scmp.le.s32.totalorder 2, %s11
    // Predicated region
    $region49: #{conv2d_module_forward.3} parent=5 // pred_check
      %p1717 = pneg %p1716
    $region50: #{conv2d_module_forward.3} parent=5 // pred_check_branch
      %1719 = sbr.rel (%p1717) target = $region52
    $region51: #{conv2d_module_forward.3} parent=5 // pred_region
      %s1720 = ssub.s32 %s11, 2
      // Predicated region
      $region53: #{conv2d_module_forward.3} parent=51 // pred_check
        %p1721 = pneg %p164
      $region54: #{conv2d_module_forward.3} parent=51 // pred_check_branch
        %1723 = sbr.rel (%p1721) target = $region56
      $region55: #{conv2d_module_forward.3} parent=51 // pred_region
        %s1724 = smul.u32 8, %s23
        %p1725 = scmp.lt.s32.totalorder %s22, 1
        %s1726 = scalar_select %p1725, %s22, 1
        %p1727 = scmp.lt.s32.totalorder %s1724, 15
        %s1728 = scalar_select %p1727, %s1724, 15
        %s1729 = smul.addr %s1728, 2
        %s1730 = smul.addr %s1726, 32
        %s1731 = sadd.s32 %s1729, %s1730
        %s1732 = smul.addr %s1731, 8
        %s1733 = scalar_lea.vmem %s5, %s1732
      $region56: #{conv2d_module_forward.3} parent=51 // pred_fallthru
        _
    $region52: #{conv2d_module_forward.3} parent=5 // pred_fallthru
      _
  $region6: #{conv2d_module_forward.3} parent=0 // loop_footer
    %s15 = sadd.s32 1, %s11
  $region7: #{conv2d_module_forward.3} parent=0 // loop_footer_branch
    %10 = sbr.rel target = $region3
  $region8: #{conv2d_module_forward.3} parent=0 // loop_exit
    _

</llo_original>
